<compile_context>
chip_gen: v6e
topology: v6e:2x2x1
jax: 0.10.0
libtpu: 0.0.40
codegen_flags: <defaults>
</compile_context>

<pallas_src>
import functools

import jax
import jax.numpy as jnp
from jax.experimental import pallas as pl
from jax.experimental.pallas import tpu as pltpu


# ------------------------------------------------------------------ kernel ---
def _fused_block_kernel(*refs, wp, wop, lin, lout, m_in, m_out, proj):
    """Fused residual block on one image in flattened, zero-padded layout.

    Per grid step:
      xe:   (1, Cin, lin + 2*m_in) bf16   padded image, flattened, zero margins
      w1:   (9, Cout, Cin)         bf16   conv1 taps (kh*3+kw), BN1 scale folded
      b1:   (Cout, 1)              f32    BN1 shift
      w2:   (9, Cout, Cout)        bf16   conv2 taps, BN2 scale folded
      b2:   (Cout, 1)              f32    BN2 shift
      identity  : mask (1, lin)        bf16  1 at interior of the padded grid
      projection: sel  (lin, lout)     bf16  0/1 subsample + re-pad selection
                  ws   (Cout, Cin)     bf16  1x1 shortcut weights, BN_s folded
                  bs   (Cout, 1)       f32   BN_s shift
      out:  (1, Cout, lout)        f32    padded-flat output (border = junk)
      h1e:  (Cout, lout + 2*m_out) bf16   VMEM scratch: zero-extended h1
    """
    it = iter(refs)
    xe_ref, w1_ref, b1_ref, w2_ref, b2_ref = (next(it) for _ in range(5))
    if proj:
        sel_ref, ws_ref, bs_ref = next(it), next(it), next(it)
    else:
        mask_ref = next(it)
    o_ref, h1e_ref = next(it), next(it)

    xe = xe_ref[0]                                            # (Cin, Lxe) bf16
    cout = w1_ref.shape[1]

    # ---- conv1 (3x3) as 9 shifted-slice matmuls over the flattened padded image.
    acc1 = jnp.zeros((cout, lin), jnp.float32)
    for t in range(9):
        d = (t // 3 - 1) * wp + (t % 3 - 1)
        acc1 += jnp.dot(w1_ref[t], xe[:, m_in + d:m_in + d + lin],
                        preferred_element_type=jnp.float32)
    h1 = jnp.maximum(acc1 + b1_ref[...], 0.0)                 # BN1 shift + ReLU

    if proj:
        # Stride handling: subsample the full-res conv1 and re-pad into conv2's
        # input grid with one 0/1 matmul (all-zero columns create the border pad).
        h1p = jnp.dot(h1.astype(jnp.bfloat16), sel_ref[...],
                      preferred_element_type=jnp.float32)
    else:
        h1p = h1 * mask_ref[...]                              # zero the pad border

    # Stage zero-extended h1 so conv2's taps are plain contiguous slices.
    h1e_ref[...] = jnp.zeros(h1e_ref.shape, h1e_ref.dtype)
    h1e_ref[:, m_out:m_out + lout] = h1p.astype(h1e_ref.dtype)

    # ---- conv2 (3x3, stride 1).
    acc2 = jnp.zeros((cout, lout), jnp.float32)
    for t in range(9):
        d = (t // 3 - 1) * wop + (t % 3 - 1)
        acc2 += jnp.dot(w2_ref[t], h1e_ref[:, m_out + d:m_out + d + lout],
                        preferred_element_type=jnp.float32)
    res = acc2 + b2_ref[...]

    # ---- shortcut.
    if proj:
        xsub = jnp.dot(xe[:, m_in:m_in + lin], sel_ref[...],
                       preferred_element_type=jnp.float32)    # (Cin, lout)
        res = res + jnp.dot(ws_ref[...], xsub.astype(jnp.bfloat16),
                            preferred_element_type=jnp.float32) + bs_ref[...]
    else:
        res = res + xe[:, m_in:m_in + lin].astype(jnp.float32)  # identity

    o_ref[0] = jnp.maximum(res, 0.0).astype(o_ref.dtype)


# --------------------------------------------------------------------- glue ---
def _fold_bn(gamma, beta, mean, var, eps=1e-5):
    scale = gamma / jnp.sqrt(var + eps)
    return scale, beta - mean * scale


def _conv3x3_taps(w_oihw, scale):
    """(Cout, Cin, 3, 3) -> (9, Cout, Cin) bf16, BN scale folded, tap = kh*3+kw."""
    w = w_oihw * scale[:, None, None, None]
    return jnp.transpose(w, (2, 3, 0, 1)).reshape(
        9, w_oihw.shape[0], w_oihw.shape[1]).astype(jnp.bfloat16)


def block_forward(x_nchw, params, stride, residual_connection):
    N, Cin, H, W = x_nchw.shape
    Cout = params["w1"].shape[0]

    Hp, Wp = H + 2, W + 2                 # 3x3 pad-1 padded grid
    Lin = Hp * Wp
    Min = Wp + 1                          # margin = max |tap shift|
    Ho = (H - 1) // stride + 1
    Wo = (W - 1) // stride + 1
    Hop, Wop = Ho + 2, Wo + 2             # conv2 padded grid
    Lout = Hop * Wop
    Mout = Wop + 1
    Lxe = Lin + 2 * Min
    Lhe = Lout + 2 * Mout

    # Fold eval-mode BN scale into the conv weights; keep shifts in f32.
    s1, sh1 = _fold_bn(*params["bn1"])
    s2, sh2 = _fold_bn(*params["bn2"])
    w1 = _conv3x3_taps(params["w1"], s1)
    w2 = _conv3x3_taps(params["w2"], s2)
    b1 = sh1[:, None].astype(jnp.float32)
    b2 = sh2[:, None].astype(jnp.float32)

    # Zero-padded, flattened, margin-extended input (bf16, channels-first per image).
    xp = jnp.pad(x_nchw.astype(jnp.bfloat16), ((0, 0), (0, 0), (1, 1), (1, 1)))
    xe = jnp.pad(xp.reshape(N, Cin, Lin), ((0, 0), (0, 0), (Min, Min)))

    args = [xe, w1, b1, w2, b2]
    in_specs = [
        pl.BlockSpec((1, Cin, Lxe), lambda n: (n, 0, 0)),
        pl.BlockSpec((9, Cout, Cin), lambda n: (0, 0, 0)),
        pl.BlockSpec((Cout, 1), lambda n: (0, 0)),
        pl.BlockSpec((9, Cout, Cout), lambda n: (0, 0, 0)),
        pl.BlockSpec((Cout, 1), lambda n: (0, 0)),
    ]

    if residual_connection:
        r = jnp.arange(Lin)
        i, j = r // Wp, r % Wp
        interior = (i >= 1) & (i <= H) & (j >= 1) & (j <= W)
        mask = interior.astype(jnp.bfloat16)[None, :]          # (1, Lin)
        args.append(mask)
        in_specs.append(pl.BlockSpec((1, Lin), lambda n: (0, 0)))
    else:
        # 0/1 selection: full-res padded grid -> stride-subsampled padded grid
        # (interior only; border columns stay all-zero = the conv2 zero pad).
        r = jnp.arange(Lout)
        i2, j2 = r // Wop, r % Wop
        valid = (i2 >= 1) & (i2 <= Ho) & (j2 >= 1) & (j2 <= Wo)
        q = (stride * (i2 - 1) + 1) * Wp + (stride * (j2 - 1) + 1)
        q = jnp.where(valid, q, -1)
        sel = ((jnp.arange(Lin)[:, None] == q[None, :]) &
               valid[None, :]).astype(jnp.bfloat16)            # (Lin, Lout)
        ss, shs = _fold_bn(*params["bns"])
        ws = (params["ws"].reshape(Cout, Cin) * ss[:, None]).astype(jnp.bfloat16)
        bs = shs[:, None].astype(jnp.float32)
        args += [sel, ws, bs]
        in_specs += [
            pl.BlockSpec((Lin, Lout), lambda n: (0, 0)),
            pl.BlockSpec((Cout, Cin), lambda n: (0, 0)),
            pl.BlockSpec((Cout, 1), lambda n: (0, 0)),
        ]

    kernel = functools.partial(
        _fused_block_kernel, wp=Wp, wop=Wop, lin=Lin, lout=Lout,
        m_in=Min, m_out=Mout, proj=not residual_connection)

    out_flat = pl.pallas_call(
        kernel,
        out_shape=jax.ShapeDtypeStruct((N, Cout, Lout), jnp.float32),
        grid=(N,),
        in_specs=in_specs,
        out_specs=pl.BlockSpec((1, Cout, Lout), lambda n: (n, 0, 0)),
        scratch_shapes=[pltpu.VMEM((Cout, Lhe), jnp.bfloat16)],
        compiler_params=pltpu.CompilerParams(
            dimension_semantics=("parallel",)),
    )(*args)

    # Drop the padded border -> NCHW.
    return out_flat.reshape(N, Cout, Hop, Wop)[:, :, 1:Ho + 1, 1:Wo + 1]


# -------------------------------------------------------------- Block model ---
def init_block_params(key, inp, outp, stride):
    keys = jax.random.split(key, 12)

    def bn_params(ks, c):
        gamma = 1.0 + 0.1 * jax.random.normal(ks[0], (c,), jnp.float32)
        beta = 0.1 * jax.random.normal(ks[1], (c,), jnp.float32)
        mean = 0.1 * jax.random.normal(ks[2], (c,), jnp.float32)
        var = jnp.abs(jax.random.normal(ks[3], (c,), jnp.float32)) + 0.5
        return gamma, beta, mean, var

    params = {
        "w1": 0.1 * jax.random.normal(keys[0], (outp, inp, 3, 3), jnp.float32),
        "bn1": bn_params(keys[1:5], outp),
        "w2": 0.1 * jax.random.normal(keys[5], (outp, outp, 3, 3), jnp.float32),
        "bn2": bn_params(keys[6:10], outp),
    }
    residual_connection = (stride == 1 and inp == outp)
    if not residual_connection:
        params["ws"] = 0.1 * jax.random.normal(keys[10], (outp, inp, 1, 1), jnp.float32)
        params["bns"] = bn_params(jax.random.split(keys[11], 4), outp)
    return params, residual_connection


# ----------------------------------------------------------- pure-JAX ref ---
def ref_block_forward(x, params, stride, residual_connection):
    def conv(x, w, s, pad):
        return jax.lax.conv_general_dilated(
            x, w, (s, s), [(pad, pad), (pad, pad)],
            dimension_numbers=("NCHW", "OIHW", "NCHW"))

    def bn(x, gamma, beta, mean, var, eps=1e-5):
        s = gamma / jnp.sqrt(var + eps)
        return x * s[None, :, None, None] + (beta - mean * s)[None, :, None, None]

    h = jax.nn.relu(bn(conv(x, params["w1"], stride, 1), *params["bn1"]))
    res = bn(conv(h, params["w2"], 1, 1), *params["bn2"])
    if residual_connection:
        res = res + x
    else:
        res = res + bn(conv(x, params["ws"], stride, 0), *params["bns"])
    return jax.nn.relu(res)


# --------------------------------------------------------------------- main ---
if __name__ == "__main__":
    key = jax.random.PRNGKey(0)
    k_x, k_p, k_x2, k_p2 = jax.random.split(key, 4)

    # --- downsampling block (projection shortcut path, stride 2) ---
    N, INP, OUTP, HW, STRIDE = 2, 4, 8, 16, 2
    x = jax.random.normal(k_x, (N, INP, HW, HW), jnp.float32)        # NCHW
    params, rc = init_block_params(k_p, INP, OUTP, STRIDE)
    fwd = jax.jit(functools.partial(block_forward, stride=STRIDE,
                                    residual_connection=rc))
    y = fwd(x, params)
    jax.block_until_ready(y)
    assert y.shape == (N, OUTP, HW // STRIDE, HW // STRIDE)
    y_ref = ref_block_forward(x, params, STRIDE, rc)
    assert float(jnp.max(jnp.abs(y - y_ref))) < 1e-1                 # bf16 tolerance

    # --- identity-shortcut block (stride 1) ---
    N2, C2, HW2, S2 = 2, 8, 8, 1
    x2 = jax.random.normal(k_x2, (N2, C2, HW2, HW2), jnp.float32)
    params2, rc2 = init_block_params(k_p2, C2, C2, S2)
    fwd2 = jax.jit(functools.partial(block_forward, stride=S2,
                                     residual_connection=rc2))
    y2 = fwd2(x2, params2)
    jax.block_until_ready(y2)
    assert y2.shape == (N2, C2, HW2, HW2)
    y2_ref = ref_block_forward(x2, params2, S2, rc2)
    assert float(jnp.max(jnp.abs(y2 - y2_ref))) < 1e-1

    print("KERNEL_OK")
</pallas_src>

<mosaic_0001>
module attributes {stable_mosaic.version = 11 : i64} {
  func.func @_fused_block_kernel(%arg0: i32, %arg1: memref<1x4x362xbf16, #tpu.memory_space<vmem>>, %arg2: memref<9x8x4xbf16, #tpu.memory_space<vmem>>, %arg3: memref<8x1xf32, #tpu.memory_space<vmem>>, %arg4: memref<9x8x8xbf16, #tpu.memory_space<vmem>>, %arg5: memref<8x1xf32, #tpu.memory_space<vmem>>, %arg6: memref<324x100xbf16, #tpu.memory_space<vmem>>, %arg7: memref<8x4xbf16, #tpu.memory_space<vmem>>, %arg8: memref<8x1xf32, #tpu.memory_space<vmem>>, %arg9: memref<1x8x100xf32, #tpu.memory_space<vmem>>, %arg10: memref<8x122xbf16, #tpu.memory_space<vmem>>) attributes {dimension_semantics = [#tpu.dimension_semantics<parallel>], iteration_bounds = array<i64: 2>, scalar_prefetch = 0 : i64, scratch_operands = 1 : i64, tpu.core_type = #tpu.core_type<tc>, window_params = [{transform_indices = @transform_0, window_bounds = array<i64: 1, 4, 362>}, {pipeline_mode = #tpu.pipeline_mode<synchronous>, transform_indices = @transform_1, window_bounds = array<i64: 9, 8, 4>}, {pipeline_mode = #tpu.pipeline_mode<synchronous>, transform_indices = @transform_2, window_bounds = array<i64: 8, 1>}, {pipeline_mode = #tpu.pipeline_mode<synchronous>, transform_indices = @transform_3, window_bounds = array<i64: 9, 8, 8>}, {pipeline_mode = #tpu.pipeline_mode<synchronous>, transform_indices = @transform_4, window_bounds = array<i64: 8, 1>}, {pipeline_mode = #tpu.pipeline_mode<synchronous>, transform_indices = @transform_5, window_bounds = array<i64: 324, 100>}, {pipeline_mode = #tpu.pipeline_mode<synchronous>, transform_indices = @transform_6, window_bounds = array<i64: 8, 4>}, {pipeline_mode = #tpu.pipeline_mode<synchronous>, transform_indices = @transform_7, window_bounds = array<i64: 8, 1>}, {transform_indices = @transform_8, window_bounds = array<i64: 1, 8, 100>}]} {
    %c0 = arith.constant 0 : index
    %c0_0 = arith.constant 0 : index
    %c0_1 = arith.constant 0 : index
    %0 = vector.load %arg1[%c0, %c0_0, %c0_1] : memref<1x4x362xbf16, #tpu.memory_space<vmem>>, vector<1x4x362xbf16>
    %1 = vector.shape_cast %0 : vector<1x4x362xbf16> to vector<4x362xbf16>
    %cst = arith.constant 0.000000e+00 : f32
    %2 = vector.broadcast %cst : f32 to vector<8x324xf32>
    %c0_2 = arith.constant 0 : index
    %c0_3 = arith.constant 0 : index
    %c0_4 = arith.constant 0 : index
    %3 = vector.load %arg2[%c0_2, %c0_3, %c0_4] : memref<9x8x4xbf16, #tpu.memory_space<vmem>>, vector<1x8x4xbf16>
    %4 = vector.shape_cast %3 : vector<1x8x4xbf16> to vector<8x4xbf16>
    %5 = vector.extract_strided_slice %1 {offsets = [0, 0], sizes = [4, 324], strides = [1, 1]} : vector<4x362xbf16> to vector<4x324xbf16>
    %cst_5 = arith.constant dense<0.000000e+00> : vector<8x324xf32>
    %6 = tpu.matmul %4, %5, %cst_5 {dimension_numbers = #tpu.dot_dimension_numbers<[1], [0], [0], [1], [0, 0, 1, 1], [], []>} : vector<8x4xbf16>, vector<4x324xbf16>, vector<8x324xf32> -> vector<8x324xf32>
    %7 = arith.addf %2, %6 : vector<8x324xf32>
    %c1 = arith.constant 1 : index
    %c0_6 = arith.constant 0 : index
    %c0_7 = arith.constant 0 : index
    %8 = vector.load %arg2[%c1, %c0_6, %c0_7] : memref<9x8x4xbf16, #tpu.memory_space<vmem>>, vector<1x8x4xbf16>
    %9 = vector.shape_cast %8 : vector<1x8x4xbf16> to vector<8x4xbf16>
    %10 = vector.extract_strided_slice %1 {offsets = [0, 1], sizes = [4, 324], strides = [1, 1]} : vector<4x362xbf16> to vector<4x324xbf16>
    %cst_8 = arith.constant dense<0.000000e+00> : vector<8x324xf32>
    %11 = tpu.matmul %9, %10, %cst_8 {dimension_numbers = #tpu.dot_dimension_numbers<[1], [0], [0], [1], [0, 0, 1, 1], [], []>} : vector<8x4xbf16>, vector<4x324xbf16>, vector<8x324xf32> -> vector<8x324xf32>
    %12 = arith.addf %7, %11 : vector<8x324xf32>
    %c2 = arith.constant 2 : index
    %c0_9 = arith.constant 0 : index
    %c0_10 = arith.constant 0 : index
    %13 = vector.load %arg2[%c2, %c0_9, %c0_10] : memref<9x8x4xbf16, #tpu.memory_space<vmem>>, vector<1x8x4xbf16>
    %14 = vector.shape_cast %13 : vector<1x8x4xbf16> to vector<8x4xbf16>
    %15 = vector.extract_strided_slice %1 {offsets = [0, 2], sizes = [4, 324], strides = [1, 1]} : vector<4x362xbf16> to vector<4x324xbf16>
    %cst_11 = arith.constant dense<0.000000e+00> : vector<8x324xf32>
    %16 = tpu.matmul %14, %15, %cst_11 {dimension_numbers = #tpu.dot_dimension_numbers<[1], [0], [0], [1], [0, 0, 1, 1], [], []>} : vector<8x4xbf16>, vector<4x324xbf16>, vector<8x324xf32> -> vector<8x324xf32>
    %17 = arith.addf %12, %16 : vector<8x324xf32>
    %c3 = arith.constant 3 : index
    %c0_12 = arith.constant 0 : index
    %c0_13 = arith.constant 0 : index
    %18 = vector.load %arg2[%c3, %c0_12, %c0_13] : memref<9x8x4xbf16, #tpu.memory_space<vmem>>, vector<1x8x4xbf16>
    %19 = vector.shape_cast %18 : vector<1x8x4xbf16> to vector<8x4xbf16>
    %20 = vector.extract_strided_slice %1 {offsets = [0, 18], sizes = [4, 324], strides = [1, 1]} : vector<4x362xbf16> to vector<4x324xbf16>
    %cst_14 = arith.constant dense<0.000000e+00> : vector<8x324xf32>
    %21 = tpu.matmul %19, %20, %cst_14 {dimension_numbers = #tpu.dot_dimension_numbers<[1], [0], [0], [1], [0, 0, 1, 1], [], []>} : vector<8x4xbf16>, vector<4x324xbf16>, vector<8x324xf32> -> vector<8x324xf32>
    %22 = arith.addf %17, %21 : vector<8x324xf32>
    %c4 = arith.constant 4 : index
    %c0_15 = arith.constant 0 : index
    %c0_16 = arith.constant 0 : index
    %23 = vector.load %arg2[%c4, %c0_15, %c0_16] : memref<9x8x4xbf16, #tpu.memory_space<vmem>>, vector<1x8x4xbf16>
    %24 = vector.shape_cast %23 : vector<1x8x4xbf16> to vector<8x4xbf16>
    %25 = vector.extract_strided_slice %1 {offsets = [0, 19], sizes = [4, 324], strides = [1, 1]} : vector<4x362xbf16> to vector<4x324xbf16>
    %cst_17 = arith.constant dense<0.000000e+00> : vector<8x324xf32>
    %26 = tpu.matmul %24, %25, %cst_17 {dimension_numbers = #tpu.dot_dimension_numbers<[1], [0], [0], [1], [0, 0, 1, 1], [], []>} : vector<8x4xbf16>, vector<4x324xbf16>, vector<8x324xf32> -> vector<8x324xf32>
    %27 = arith.addf %22, %26 : vector<8x324xf32>
    %c5 = arith.constant 5 : index
    %c0_18 = arith.constant 0 : index
    %c0_19 = arith.constant 0 : index
    %28 = vector.load %arg2[%c5, %c0_18, %c0_19] : memref<9x8x4xbf16, #tpu.memory_space<vmem>>, vector<1x8x4xbf16>
    %29 = vector.shape_cast %28 : vector<1x8x4xbf16> to vector<8x4xbf16>
    %30 = vector.extract_strided_slice %1 {offsets = [0, 20], sizes = [4, 324], strides = [1, 1]} : vector<4x362xbf16> to vector<4x324xbf16>
    %cst_20 = arith.constant dense<0.000000e+00> : vector<8x324xf32>
    %31 = tpu.matmul %29, %30, %cst_20 {dimension_numbers = #tpu.dot_dimension_numbers<[1], [0], [0], [1], [0, 0, 1, 1], [], []>} : vector<8x4xbf16>, vector<4x324xbf16>, vector<8x324xf32> -> vector<8x324xf32>
    %32 = arith.addf %27, %31 : vector<8x324xf32>
    %c6 = arith.constant 6 : index
    %c0_21 = arith.constant 0 : index
    %c0_22 = arith.constant 0 : index
    %33 = vector.load %arg2[%c6, %c0_21, %c0_22] : memref<9x8x4xbf16, #tpu.memory_space<vmem>>, vector<1x8x4xbf16>
    %34 = vector.shape_cast %33 : vector<1x8x4xbf16> to vector<8x4xbf16>
    %35 = vector.extract_strided_slice %1 {offsets = [0, 36], sizes = [4, 324], strides = [1, 1]} : vector<4x362xbf16> to vector<4x324xbf16>
    %cst_23 = arith.constant dense<0.000000e+00> : vector<8x324xf32>
    %36 = tpu.matmul %34, %35, %cst_23 {dimension_numbers = #tpu.dot_dimension_numbers<[1], [0], [0], [1], [0, 0, 1, 1], [], []>} : vector<8x4xbf16>, vector<4x324xbf16>, vector<8x324xf32> -> vector<8x324xf32>
    %37 = arith.addf %32, %36 : vector<8x324xf32>
    %c7 = arith.constant 7 : index
    %c0_24 = arith.constant 0 : index
    %c0_25 = arith.constant 0 : index
    %38 = vector.load %arg2[%c7, %c0_24, %c0_25] : memref<9x8x4xbf16, #tpu.memory_space<vmem>>, vector<1x8x4xbf16>
    %39 = vector.shape_cast %38 : vector<1x8x4xbf16> to vector<8x4xbf16>
    %40 = vector.extract_strided_slice %1 {offsets = [0, 37], sizes = [4, 324], strides = [1, 1]} : vector<4x362xbf16> to vector<4x324xbf16>
    %cst_26 = arith.constant dense<0.000000e+00> : vector<8x324xf32>
    %41 = tpu.matmul %39, %40, %cst_26 {dimension_numbers = #tpu.dot_dimension_numbers<[1], [0], [0], [1], [0, 0, 1, 1], [], []>} : vector<8x4xbf16>, vector<4x324xbf16>, vector<8x324xf32> -> vector<8x324xf32>
    %42 = arith.addf %37, %41 : vector<8x324xf32>
    %c8 = arith.constant 8 : index
    %c0_27 = arith.constant 0 : index
    %c0_28 = arith.constant 0 : index
    %43 = vector.load %arg2[%c8, %c0_27, %c0_28] : memref<9x8x4xbf16, #tpu.memory_space<vmem>>, vector<1x8x4xbf16>
    %44 = vector.shape_cast %43 : vector<1x8x4xbf16> to vector<8x4xbf16>
    %45 = vector.extract_strided_slice %1 {offsets = [0, 38], sizes = [4, 324], strides = [1, 1]} : vector<4x362xbf16> to vector<4x324xbf16>
    %cst_29 = arith.constant dense<0.000000e+00> : vector<8x324xf32>
    %46 = tpu.matmul %44, %45, %cst_29 {dimension_numbers = #tpu.dot_dimension_numbers<[1], [0], [0], [1], [0, 0, 1, 1], [], []>} : vector<8x4xbf16>, vector<4x324xbf16>, vector<8x324xf32> -> vector<8x324xf32>
    %47 = arith.addf %42, %46 : vector<8x324xf32>
    %c0_30 = arith.constant 0 : index
    %c0_31 = arith.constant 0 : index
    %48 = vector.load %arg3[%c0_30, %c0_31] : memref<8x1xf32, #tpu.memory_space<vmem>>, vector<8x1xf32>
    %49 = vector.broadcast %48 : vector<8x1xf32> to vector<8x324xf32>
    %50 = arith.addf %47, %49 : vector<8x324xf32>
    %cst_32 = arith.constant 0.000000e+00 : f32
    %51 = vector.broadcast %cst_32 : f32 to vector<8x324xf32>
    %52 = arith.maximumf %50, %51 : vector<8x324xf32>
    %53 = arith.truncf %52 : vector<8x324xf32> to vector<8x324xbf16>
    %c0_33 = arith.constant 0 : index
    %c0_34 = arith.constant 0 : index
    %54 = vector.load %arg6[%c0_33, %c0_34] : memref<324x100xbf16, #tpu.memory_space<vmem>>, vector<324x100xbf16>
    %cst_35 = arith.constant dense<0.000000e+00> : vector<8x100xf32>
    %55 = tpu.matmul %53, %54, %cst_35 {dimension_numbers = #tpu.dot_dimension_numbers<[1], [0], [0], [1], [0, 0, 1, 1], [], []>} : vector<8x324xbf16>, vector<324x100xbf16>, vector<8x100xf32> -> vector<8x100xf32>
    %cst_36 = arith.constant 0.000000e+00 : bf16
    %56 = vector.broadcast %cst_36 : bf16 to vector<8x122xbf16>
    %c0_37 = arith.constant 0 : index
    %c0_38 = arith.constant 0 : index
    %57 = vector.load %arg10[%c0_37, %c0_38] : memref<8x122xbf16, #tpu.memory_space<vmem>>, vector<8x122xbf16>
    tpu.vector_store %arg10[%c0_37, %c0_38], %56 {strides = array<i32>} : memref<8x122xbf16, #tpu.memory_space<vmem>>, vector<8x122xbf16>,
    %58 = arith.truncf %55 : vector<8x100xf32> to vector<8x100xbf16>
    %c0_39 = arith.constant 0 : index
    %c11 = arith.constant 11 : index
    %59 = vector.load %arg10[%c0_39, %c11] : memref<8x122xbf16, #tpu.memory_space<vmem>>, vector<8x100xbf16>
    tpu.vector_store %arg10[%c0_39, %c11], %58 {strides = array<i32>} : memref<8x122xbf16, #tpu.memory_space<vmem>>, vector<8x100xbf16>,
    %cst_40 = arith.constant 0.000000e+00 : f32
    %60 = vector.broadcast %cst_40 : f32 to vector<8x100xf32>
    %c0_41 = arith.constant 0 : index
    %c0_42 = arith.constant 0 : index
    %c0_43 = arith.constant 0 : index
    %61 = vector.load %arg4[%c0_41, %c0_42, %c0_43] : memref<9x8x8xbf16, #tpu.memory_space<vmem>>, vector<1x8x8xbf16>
    %62 = vector.shape_cast %61 : vector<1x8x8xbf16> to vector<8x8xbf16>
    %c0_44 = arith.constant 0 : index
    %c0_45 = arith.constant 0 : index
    %63 = vector.load %arg10[%c0_44, %c0_45] : memref<8x122xbf16, #tpu.memory_space<vmem>>, vector<8x100xbf16>
    %cst_46 = arith.constant dense<0.000000e+00> : vector<8x100xf32>
    %64 = tpu.matmul %62, %63, %cst_46 {dimension_numbers = #tpu.dot_dimension_numbers<[1], [0], [0], [1], [0, 0, 1, 1], [], []>} : vector<8x8xbf16>, vector<8x100xbf16>, vector<8x100xf32> -> vector<8x100xf32>
    %65 = arith.addf %60, %64 : vector<8x100xf32>
    %c1_47 = arith.constant 1 : index
    %c0_48 = arith.constant 0 : index
    %c0_49 = arith.constant 0 : index
    %66 = vector.load %arg4[%c1_47, %c0_48, %c0_49] : memref<9x8x8xbf16, #tpu.memory_space<vmem>>, vector<1x8x8xbf16>
    %67 = vector.shape_cast %66 : vector<1x8x8xbf16> to vector<8x8xbf16>
    %c0_50 = arith.constant 0 : index
    %c1_51 = arith.constant 1 : index
    %68 = vector.load %arg10[%c0_50, %c1_51] : memref<8x122xbf16, #tpu.memory_space<vmem>>, vector<8x100xbf16>
    %cst_52 = arith.constant dense<0.000000e+00> : vector<8x100xf32>
    %69 = tpu.matmul %67, %68, %cst_52 {dimension_numbers = #tpu.dot_dimension_numbers<[1], [0], [0], [1], [0, 0, 1, 1], [], []>} : vector<8x8xbf16>, vector<8x100xbf16>, vector<8x100xf32> -> vector<8x100xf32>
    %70 = arith.addf %65, %69 : vector<8x100xf32>
    %c2_53 = arith.constant 2 : index
    %c0_54 = arith.constant 0 : index
    %c0_55 = arith.constant 0 : index
    %71 = vector.load %arg4[%c2_53, %c0_54, %c0_55] : memref<9x8x8xbf16, #tpu.memory_space<vmem>>, vector<1x8x8xbf16>
    %72 = vector.shape_cast %71 : vector<1x8x8xbf16> to vector<8x8xbf16>
    %c0_56 = arith.constant 0 : index
    %c2_57 = arith.constant 2 : index
    %73 = vector.load %arg10[%c0_56, %c2_57] : memref<8x122xbf16, #tpu.memory_space<vmem>>, vector<8x100xbf16>
    %cst_58 = arith.constant dense<0.000000e+00> : vector<8x100xf32>
    %74 = tpu.matmul %72, %73, %cst_58 {dimension_numbers = #tpu.dot_dimension_numbers<[1], [0], [0], [1], [0, 0, 1, 1], [], []>} : vector<8x8xbf16>, vector<8x100xbf16>, vector<8x100xf32> -> vector<8x100xf32>
    %75 = arith.addf %70, %74 : vector<8x100xf32>
    %c3_59 = arith.constant 3 : index
    %c0_60 = arith.constant 0 : index
    %c0_61 = arith.constant 0 : index
    %76 = vector.load %arg4[%c3_59, %c0_60, %c0_61] : memref<9x8x8xbf16, #tpu.memory_space<vmem>>, vector<1x8x8xbf16>
    %77 = vector.shape_cast %76 : vector<1x8x8xbf16> to vector<8x8xbf16>
    %c0_62 = arith.constant 0 : index
    %c10 = arith.constant 10 : index
    %78 = vector.load %arg10[%c0_62, %c10] : memref<8x122xbf16, #tpu.memory_space<vmem>>, vector<8x100xbf16>
    %cst_63 = arith.constant dense<0.000000e+00> : vector<8x100xf32>
    %79 = tpu.matmul %77, %78, %cst_63 {dimension_numbers = #tpu.dot_dimension_numbers<[1], [0], [0], [1], [0, 0, 1, 1], [], []>} : vector<8x8xbf16>, vector<8x100xbf16>, vector<8x100xf32> -> vector<8x100xf32>
    %80 = arith.addf %75, %79 : vector<8x100xf32>
    %c4_64 = arith.constant 4 : index
    %c0_65 = arith.constant 0 : index
    %c0_66 = arith.constant 0 : index
    %81 = vector.load %arg4[%c4_64, %c0_65, %c0_66] : memref<9x8x8xbf16, #tpu.memory_space<vmem>>, vector<1x8x8xbf16>
    %82 = vector.shape_cast %81 : vector<1x8x8xbf16> to vector<8x8xbf16>
    %c0_67 = arith.constant 0 : index
    %c11_68 = arith.constant 11 : index
    %83 = vector.load %arg10[%c0_67, %c11_68] : memref<8x122xbf16, #tpu.memory_space<vmem>>, vector<8x100xbf16>
    %cst_69 = arith.constant dense<0.000000e+00> : vector<8x100xf32>
    %84 = tpu.matmul %82, %83, %cst_69 {dimension_numbers = #tpu.dot_dimension_numbers<[1], [0], [0], [1], [0, 0, 1, 1], [], []>} : vector<8x8xbf16>, vector<8x100xbf16>, vector<8x100xf32> -> vector<8x100xf32>
    %85 = arith.addf %80, %84 : vector<8x100xf32>
    %c5_70 = arith.constant 5 : index
    %c0_71 = arith.constant 0 : index
    %c0_72 = arith.constant 0 : index
    %86 = vector.load %arg4[%c5_70, %c0_71, %c0_72] : memref<9x8x8xbf16, #tpu.memory_space<vmem>>, vector<1x8x8xbf16>
    %87 = vector.shape_cast %86 : vector<1x8x8xbf16> to vector<8x8xbf16>
    %c0_73 = arith.constant 0 : index
    %c12 = arith.constant 12 : index
    %88 = vector.load %arg10[%c0_73, %c12] : memref<8x122xbf16, #tpu.memory_space<vmem>>, vector<8x100xbf16>
    %cst_74 = arith.constant dense<0.000000e+00> : vector<8x100xf32>
    %89 = tpu.matmul %87, %88, %cst_74 {dimension_numbers = #tpu.dot_dimension_numbers<[1], [0], [0], [1], [0, 0, 1, 1], [], []>} : vector<8x8xbf16>, vector<8x100xbf16>, vector<8x100xf32> -> vector<8x100xf32>
    %90 = arith.addf %85, %89 : vector<8x100xf32>
    %c6_75 = arith.constant 6 : index
    %c0_76 = arith.constant 0 : index
    %c0_77 = arith.constant 0 : index
    %91 = vector.load %arg4[%c6_75, %c0_76, %c0_77] : memref<9x8x8xbf16, #tpu.memory_space<vmem>>, vector<1x8x8xbf16>
    %92 = vector.shape_cast %91 : vector<1x8x8xbf16> to vector<8x8xbf16>
    %c0_78 = arith.constant 0 : index
    %c20 = arith.constant 20 : index
    %93 = vector.load %arg10[%c0_78, %c20] : memref<8x122xbf16, #tpu.memory_space<vmem>>, vector<8x100xbf16>
    %cst_79 = arith.constant dense<0.000000e+00> : vector<8x100xf32>
    %94 = tpu.matmul %92, %93, %cst_79 {dimension_numbers = #tpu.dot_dimension_numbers<[1], [0], [0], [1], [0, 0, 1, 1], [], []>} : vector<8x8xbf16>, vector<8x100xbf16>, vector<8x100xf32> -> vector<8x100xf32>
    %95 = arith.addf %90, %94 : vector<8x100xf32>
    %c7_80 = arith.constant 7 : index
    %c0_81 = arith.constant 0 : index
    %c0_82 = arith.constant 0 : index
    %96 = vector.load %arg4[%c7_80, %c0_81, %c0_82] : memref<9x8x8xbf16, #tpu.memory_space<vmem>>, vector<1x8x8xbf16>
    %97 = vector.shape_cast %96 : vector<1x8x8xbf16> to vector<8x8xbf16>
    %c0_83 = arith.constant 0 : index
    %c21 = arith.constant 21 : index
    %98 = vector.load %arg10[%c0_83, %c21] : memref<8x122xbf16, #tpu.memory_space<vmem>>, vector<8x100xbf16>
    %cst_84 = arith.constant dense<0.000000e+00> : vector<8x100xf32>
    %99 = tpu.matmul %97, %98, %cst_84 {dimension_numbers = #tpu.dot_dimension_numbers<[1], [0], [0], [1], [0, 0, 1, 1], [], []>} : vector<8x8xbf16>, vector<8x100xbf16>, vector<8x100xf32> -> vector<8x100xf32>
    %100 = arith.addf %95, %99 : vector<8x100xf32>
    %c8_85 = arith.constant 8 : index
    %c0_86 = arith.constant 0 : index
    %c0_87 = arith.constant 0 : index
    %101 = vector.load %arg4[%c8_85, %c0_86, %c0_87] : memref<9x8x8xbf16, #tpu.memory_space<vmem>>, vector<1x8x8xbf16>
    %102 = vector.shape_cast %101 : vector<1x8x8xbf16> to vector<8x8xbf16>
    %c0_88 = arith.constant 0 : index
    %c22 = arith.constant 22 : index
    %103 = vector.load %arg10[%c0_88, %c22] : memref<8x122xbf16, #tpu.memory_space<vmem>>, vector<8x100xbf16>
    %cst_89 = arith.constant dense<0.000000e+00> : vector<8x100xf32>
    %104 = tpu.matmul %102, %103, %cst_89 {dimension_numbers = #tpu.dot_dimension_numbers<[1], [0], [0], [1], [0, 0, 1, 1], [], []>} : vector<8x8xbf16>, vector<8x100xbf16>, vector<8x100xf32> -> vector<8x100xf32>
    %105 = arith.addf %100, %104 : vector<8x100xf32>
    %c0_90 = arith.constant 0 : index
    %c0_91 = arith.constant 0 : index
    %106 = vector.load %arg5[%c0_90, %c0_91] : memref<8x1xf32, #tpu.memory_space<vmem>>, vector<8x1xf32>
    %107 = vector.broadcast %106 : vector<8x1xf32> to vector<8x100xf32>
    %108 = arith.addf %105, %107 : vector<8x100xf32>
    %109 = vector.extract_strided_slice %1 {offsets = [0, 19], sizes = [4, 324], strides = [1, 1]} : vector<4x362xbf16> to vector<4x324xbf16>
    %c0_92 = arith.constant 0 : index
    %c0_93 = arith.constant 0 : index
    %110 = vector.load %arg6[%c0_92, %c0_93] : memref<324x100xbf16, #tpu.memory_space<vmem>>, vector<324x100xbf16>
    %cst_94 = arith.constant dense<0.000000e+00> : vector<4x100xf32>
    %111 = tpu.matmul %109, %110, %cst_94 {dimension_numbers = #tpu.dot_dimension_numbers<[1], [0], [0], [1], [0, 0, 1, 1], [], []>} : vector<4x324xbf16>, vector<324x100xbf16>, vector<4x100xf32> -> vector<4x100xf32>
    %c0_95 = arith.constant 0 : index
    %c0_96 = arith.constant 0 : index
    %112 = vector.load %arg7[%c0_95, %c0_96] : memref<8x4xbf16, #tpu.memory_space<vmem>>, vector<8x4xbf16>
    %113 = arith.truncf %111 : vector<4x100xf32> to vector<4x100xbf16>
    %cst_97 = arith.constant dense<0.000000e+00> : vector<8x100xf32>
    %114 = tpu.matmul %112, %113, %cst_97 {dimension_numbers = #tpu.dot_dimension_numbers<[1], [0], [0], [1], [0, 0, 1, 1], [], []>} : vector<8x4xbf16>, vector<4x100xbf16>, vector<8x100xf32> -> vector<8x100xf32>
    %115 = arith.addf %108, %114 : vector<8x100xf32>
    %c0_98 = arith.constant 0 : index
    %c0_99 = arith.constant 0 : index
    %116 = vector.load %arg8[%c0_98, %c0_99] : memref<8x1xf32, #tpu.memory_space<vmem>>, vector<8x1xf32>
    %117 = vector.broadcast %116 : vector<8x1xf32> to vector<8x100xf32>
    %118 = arith.addf %115, %117 : vector<8x100xf32>
    %cst_100 = arith.constant 0.000000e+00 : f32
    %119 = vector.broadcast %cst_100 : f32 to vector<8x100xf32>
    %120 = arith.maximumf %118, %119 : vector<8x100xf32>
    %c0_101 = arith.constant 0 : index
    %c0_102 = arith.constant 0 : index
    %c0_103 = arith.constant 0 : index
    %121 = vector.load %arg9[%c0_101, %c0_102, %c0_103] : memref<1x8x100xf32, #tpu.memory_space<vmem>>, vector<1x8x100xf32>
    %122 = vector.shape_cast %121 : vector<1x8x100xf32> to vector<8x100xf32>
    %123 = vector.shape_cast %120 : vector<8x100xf32> to vector<1x8x100xf32>
    tpu.vector_store %arg9[%c0_101, %c0_102, %c0_103], %123 {strides = array<i32>} : memref<1x8x100xf32, #tpu.memory_space<vmem>>, vector<1x8x100xf32>,
    return
  }
  func.func @transform_0(%arg0: i32) -> (i32, i32, i32) {
    %c0_i32 = arith.constant 0 : i32
    %c0_i32_0 = arith.constant 0 : i32
    %c0_i32_1 = arith.constant 0 : i32
    return %arg0, %c0_i32, %c0_i32_0 : i32, i32, i32
  }
  func.func @transform_1(%arg0: i32) -> (i32, i32, i32) {
    %c0_i32 = arith.constant 0 : i32
    %c0_i32_0 = arith.constant 0 : i32
    %c0_i32_1 = arith.constant 0 : i32
    %c0_i32_2 = arith.constant 0 : i32
    return %c0_i32, %c0_i32_0, %c0_i32_1 : i32, i32, i32
  }
  func.func @transform_2(%arg0: i32) -> (i32, i32) {
    %c0_i32 = arith.constant 0 : i32
    %c0_i32_0 = arith.constant 0 : i32
    %c0_i32_1 = arith.constant 0 : i32
    return %c0_i32, %c0_i32_0 : i32, i32
  }
  func.func @transform_3(%arg0: i32) -> (i32, i32, i32) {
    %c0_i32 = arith.constant 0 : i32
    %c0_i32_0 = arith.constant 0 : i32
    %c0_i32_1 = arith.constant 0 : i32
    %c0_i32_2 = arith.constant 0 : i32
    return %c0_i32, %c0_i32_0, %c0_i32_1 : i32, i32, i32
  }
  func.func @transform_4(%arg0: i32) -> (i32, i32) {
    %c0_i32 = arith.constant 0 : i32
    %c0_i32_0 = arith.constant 0 : i32
    %c0_i32_1 = arith.constant 0 : i32
    return %c0_i32, %c0_i32_0 : i32, i32
  }
  func.func @transform_5(%arg0: i32) -> (i32, i32) {
    %c0_i32 = arith.constant 0 : i32
    %c0_i32_0 = arith.constant 0 : i32
    %c0_i32_1 = arith.constant 0 : i32
    return %c0_i32, %c0_i32_0 : i32, i32
  }
  func.func @transform_6(%arg0: i32) -> (i32, i32) {
    %c0_i32 = arith.constant 0 : i32
    %c0_i32_0 = arith.constant 0 : i32
    %c0_i32_1 = arith.constant 0 : i32
    return %c0_i32, %c0_i32_0 : i32, i32
  }
  func.func @transform_7(%arg0: i32) -> (i32, i32) {
    %c0_i32 = arith.constant 0 : i32
    %c0_i32_0 = arith.constant 0 : i32
    %c0_i32_1 = arith.constant 0 : i32
    return %c0_i32, %c0_i32_0 : i32, i32
  }
  func.func @transform_8(%arg0: i32) -> (i32, i32, i32) {
    %c0_i32 = arith.constant 0 : i32
    %c0_i32_0 = arith.constant 0 : i32
    %c0_i32_1 = arith.constant 0 : i32
    return %arg0, %c0_i32, %c0_i32_0 : i32, i32, i32
  }
}

</mosaic_0001>

<llo_original>
// kernel: block_forward.1
$region0: #{block_forward.1}
  #allocation0 [shape = 'u32[]', space=smem, size = 0x4, offset = 0x4, fixed_abs, tag = 'smem constant byte address 0x4 - core index']
  #allocation1 [shape = 'u32[144,128]{1,0:T(1,128)}', space=vmem, size = 0x12000, scoped, tag = 'internal scratch']
  #allocation2 [shape = 'bf16[8,122]{1,0:T(8,128)(2,1)}', space=vmem, size = 0x800, scoped, tag = 'scratch operand']
  %s0 = inlined_call_operand.vmem [shape: bf16[2,4,362], index: 0, kind: input, shape index: {}]
  %s1 = inlined_call_operand.vmem [shape: bf16[9,8,4], index: 1, kind: input, shape index: {}]
  %s2 = inlined_call_operand.vmem [shape: f32[8,1], index: 2, kind: input, shape index: {}]
  %s3 = inlined_call_operand.vmem [shape: bf16[9,8,8], index: 3, kind: input, shape index: {}]
  %s4 = inlined_call_operand.vmem [shape: f32[8,1], index: 4, kind: input, shape index: {}]
  %s5 = inlined_call_operand.vmem [shape: bf16[324,100], index: 5, kind: input, shape index: {}]
  %s6 = inlined_call_operand.vmem [shape: bf16[8,4], index: 6, kind: input, shape index: {}]
  %s7 = inlined_call_operand.vmem [shape: f32[8,1], index: 7, kind: input, shape index: {}]
  %s8 = inlined_call_operand.vmem [shape: f32[2,8,100], index: 8, kind: output, shape index: {}]
  %s9 = sld [smem:[#allocation0]]
  $region65: #{block_forward.1} parent=0
    _
  %s11 = ssub.s32 1, %s9
  %s12 = scalar_select 0, %s11, %s9
  loop: start=0, step=1, limit=4
  $region2: #{block_forward.1} parent=0 // loop_pre_header
    _
  $region3: #{block_forward.1} parent=0 // loop_header
    %s14 = sphi 0, %s18
    %p15 = scmp.ge.s32.totalorder %s14, 4
    %s24 = sphi 0, %s26
    %s27 = sphi 0, %s24
    %s28 = sphi 0, %s27
    %s44 = sphi 0, %s28
    %s48 = sphi 0, %s48
    %s50 = sphi 0, %s48
    %s51 = sphi 0, %s50
    %s65 = sphi 0, %s51
    %s69 = sphi 0, %s69
    %s71 = sphi 0, %s69
    %s72 = sphi 0, %s71
    %s86 = sphi 0, %s72
    %s90 = sphi 0, %s90
    %s92 = sphi 0, %s90
    %s93 = sphi 0, %s92
    %s107 = sphi 0, %s93
    %s111 = sphi 0, %s111
    %s113 = sphi 0, %s111
    %s114 = sphi 0, %s113
    %s128 = sphi 0, %s114
    %s132 = sphi 0, %s132
    %s134 = sphi 0, %s132
    %s135 = sphi 0, %s134
    %s149 = sphi 0, %s135
    %s153 = sphi 0, %s153
    %s155 = sphi 0, %s153
    %s156 = sphi 0, %s155
    %s170 = sphi 0, %s156
    %s174 = sphi 0, %s174
    %s176 = sphi 0, %s174
    %s177 = sphi 0, %s176
    %s191 = sphi 0, %s177
    %s197 = sphi 0, %s199
    %s200 = sphi 0, %s197
    %s201 = sphi 0, %s200
    %s217 = sphi 0, %s201
  $region4: #{block_forward.1} parent=0 // loop_header_branch
    %17 = sbr.rel (%p15) target = $region8
  $region5: #{block_forward.1} parent=0 // loop_body
    %s19 = ssub.s32 %s14, 1
    %s20 = ssub.s32 %s14, 2
    %s21 = sadd.s32 %s14, 1
    %s22 = ssub.s32 %s14, %s21
    %p23 = scmp.eq.s32.totalorder %s22, 0
    %s25 = sadd.s32 %s24, 1
    %s26 = scalar_select %p23, %s24, %s25
    %p29 = pneg %p23
    %p30 = scmp.eq.s32.totalorder %s14, 1
    %p31 = por %p29, %p30
    %p32 = scmp.ne.s32.totalorder %s24, %s27
    %p33 = scmp.eq.s32.totalorder %s14, 0
    %p34 = por %p32, %p33
    %p35 = scmp.ne.s32.totalorder %s24, %s27
    %p36 = scmp.eq.s32.totalorder %s19, 1
    %p37 = por %p35, %p36
    %p38 = scmp.ne.s32.totalorder %s27, %s28
    %p39 = scmp.eq.s32.totalorder %s19, 0
    %p40 = por %p38, %p39
    %p41 = scmp.ne.s32.totalorder %s27, %s28
    %p42 = scmp.eq.s32.totalorder %s20, 1
    %p43 = por %p41, %p42
    %p45 = scmp.ne.s32.totalorder %s28, %s44
    %p46 = scmp.eq.s32.totalorder %s20, 0
    %p47 = por %p45, %p46
    %s49 = sadd.s32 %s48, 1
    %p52 = scmp.eq.s32.totalorder %s14, 1
    %p53 = scmp.ne.s32.totalorder %s48, %s50
    %p54 = scmp.eq.s32.totalorder %s14, 0
    %p55 = por %p53, %p54
    %p56 = scmp.ne.s32.totalorder %s48, %s50
    %p57 = scmp.eq.s32.totalorder %s19, 1
    %p58 = por %p56, %p57
    %p59 = scmp.ne.s32.totalorder %s50, %s51
    %p60 = scmp.eq.s32.totalorder %s19, 0
    %p61 = por %p59, %p60
    %p62 = scmp.ne.s32.totalorder %s50, %s51
    %p63 = scmp.eq.s32.totalorder %s20, 1
    %p64 = por %p62, %p63
    %p66 = scmp.ne.s32.totalorder %s51, %s65
    %p67 = scmp.eq.s32.totalorder %s20, 0
    %p68 = por %p66, %p67
    %s70 = sadd.s32 %s69, 1
    %p73 = scmp.eq.s32.totalorder %s14, 1
    %p74 = scmp.ne.s32.totalorder %s69, %s71
    %p75 = scmp.eq.s32.totalorder %s14, 0
    %p76 = por %p74, %p75
    %p77 = scmp.ne.s32.totalorder %s69, %s71
    %p78 = scmp.eq.s32.totalorder %s19, 1
    %p79 = por %p77, %p78
    %p80 = scmp.ne.s32.totalorder %s71, %s72
    %p81 = scmp.eq.s32.totalorder %s19, 0
    %p82 = por %p80, %p81
    %p83 = scmp.ne.s32.totalorder %s71, %s72
    %p84 = scmp.eq.s32.totalorder %s20, 1
    %p85 = por %p83, %p84
    %p87 = scmp.ne.s32.totalorder %s72, %s86
    %p88 = scmp.eq.s32.totalorder %s20, 0
    %p89 = por %p87, %p88
    %s91 = sadd.s32 %s90, 1
    %p94 = scmp.eq.s32.totalorder %s14, 1
    %p95 = scmp.ne.s32.totalorder %s90, %s92
    %p96 = scmp.eq.s32.totalorder %s14, 0
    %p97 = por %p95, %p96
    %p98 = scmp.ne.s32.totalorder %s90, %s92
    %p99 = scmp.eq.s32.totalorder %s19, 1
    %p100 = por %p98, %p99
    %p101 = scmp.ne.s32.totalorder %s92, %s93
    %p102 = scmp.eq.s32.totalorder %s19, 0
    %p103 = por %p101, %p102
    %p104 = scmp.ne.s32.totalorder %s92, %s93
    %p105 = scmp.eq.s32.totalorder %s20, 1
    %p106 = por %p104, %p105
    %p108 = scmp.ne.s32.totalorder %s93, %s107
    %p109 = scmp.eq.s32.totalorder %s20, 0
    %p110 = por %p108, %p109
    %s112 = sadd.s32 %s111, 1
    %p115 = scmp.eq.s32.totalorder %s14, 1
    %p116 = scmp.ne.s32.totalorder %s111, %s113
    %p117 = scmp.eq.s32.totalorder %s14, 0
    %p118 = por %p116, %p117
    %p119 = scmp.ne.s32.totalorder %s111, %s113
    %p120 = scmp.eq.s32.totalorder %s19, 1
    %p121 = por %p119, %p120
    %p122 = scmp.ne.s32.totalorder %s113, %s114
    %p123 = scmp.eq.s32.totalorder %s19, 0
    %p124 = por %p122, %p123
    %p125 = scmp.ne.s32.totalorder %s113, %s114
    %p126 = scmp.eq.s32.totalorder %s20, 1
    %p127 = por %p125, %p126
    %p129 = scmp.ne.s32.totalorder %s114, %s128
    %p130 = scmp.eq.s32.totalorder %s20, 0
    %p131 = por %p129, %p130
    %s133 = sadd.s32 %s132, 1
    %p136 = scmp.eq.s32.totalorder %s14, 1
    %p137 = scmp.ne.s32.totalorder %s132, %s134
    %p138 = scmp.eq.s32.totalorder %s14, 0
    %p139 = por %p137, %p138
    %p140 = scmp.ne.s32.totalorder %s132, %s134
    %p141 = scmp.eq.s32.totalorder %s19, 1
    %p142 = por %p140, %p141
    %p143 = scmp.ne.s32.totalorder %s134, %s135
    %p144 = scmp.eq.s32.totalorder %s19, 0
    %p145 = por %p143, %p144
    %p146 = scmp.ne.s32.totalorder %s134, %s135
    %p147 = scmp.eq.s32.totalorder %s20, 1
    %p148 = por %p146, %p147
    %p150 = scmp.ne.s32.totalorder %s135, %s149
    %p151 = scmp.eq.s32.totalorder %s20, 0
    %p152 = por %p150, %p151
    %s154 = sadd.s32 %s153, 1
    %p157 = scmp.eq.s32.totalorder %s14, 1
    %p158 = scmp.ne.s32.totalorder %s153, %s155
    %p159 = scmp.eq.s32.totalorder %s14, 0
    %p160 = por %p158, %p159
    %p161 = scmp.ne.s32.totalorder %s153, %s155
    %p162 = scmp.eq.s32.totalorder %s19, 1
    %p163 = por %p161, %p162
    %p164 = scmp.ne.s32.totalorder %s155, %s156
    %p165 = scmp.eq.s32.totalorder %s19, 0
    %p166 = por %p164, %p165
    %p167 = scmp.ne.s32.totalorder %s155, %s156
    %p168 = scmp.eq.s32.totalorder %s20, 1
    %p169 = por %p167, %p168
    %p171 = scmp.ne.s32.totalorder %s156, %s170
    %p172 = scmp.eq.s32.totalorder %s20, 0
    %p173 = por %p171, %p172
    %s175 = sadd.s32 %s174, 1
    %p178 = scmp.eq.s32.totalorder %s14, 1
    %p179 = scmp.ne.s32.totalorder %s174, %s176
    %p180 = scmp.eq.s32.totalorder %s14, 0
    %p181 = por %p179, %p180
    %p182 = scmp.ne.s32.totalorder %s174, %s176
    %p183 = scmp.eq.s32.totalorder %s19, 1
    %p184 = por %p182, %p183
    %p185 = scmp.ne.s32.totalorder %s176, %s177
    %p186 = scmp.eq.s32.totalorder %s19, 0
    %p187 = por %p185, %p186
    %p188 = scmp.ne.s32.totalorder %s176, %s177
    %p189 = scmp.eq.s32.totalorder %s20, 1
    %p190 = por %p188, %p189
    %p192 = scmp.ne.s32.totalorder %s177, %s191
    %p193 = scmp.eq.s32.totalorder %s20, 0
    %p194 = por %p192, %p193
    %s195 = ssub.s32 %s14, %s21
    %p196 = scmp.eq.s32.totalorder %s195, 0
    %s198 = sadd.s32 %s197, 1
    %s199 = scalar_select %p196, %s197, %s198
    %p202 = pneg %p196
    %p203 = scmp.eq.s32.totalorder %s14, 1
    %p204 = por %p202, %p203
    %p205 = scmp.ne.s32.totalorder %s197, %s200
    %p206 = scmp.eq.s32.totalorder %s14, 0
    %p207 = por %p205, %p206
    %p208 = scmp.ne.s32.totalorder %s197, %s200
    %p209 = scmp.eq.s32.totalorder %s19, 1
    %p210 = por %p208, %p209
    %p211 = scmp.ne.s32.totalorder %s200, %s201
    %p212 = scmp.eq.s32.totalorder %s19, 0
    %p213 = por %p211, %p212
    %p214 = scmp.ne.s32.totalorder %s200, %s201
    %p215 = scmp.eq.s32.totalorder %s20, 1
    %p216 = por %p214, %p215
    %p218 = scmp.ne.s32.totalorder %s201, %s217
    %p219 = scmp.eq.s32.totalorder %s20, 0
    %p220 = por %p218, %p219
    %p221 = scmp.le.s32.totalorder 1, %s14
    %p222 = scmp.lt.s32.totalorder %s14, 3
    %p223 = pnand %p221, %p222
    %p224 = pneg %p223
    // Predicated region
    $region9: #{block_forward.1} parent=5 // pred_check
      _
    $region10: #{block_forward.1} parent=5 // pred_check_branch
      %226 = sbr.rel (%p223) target = $region12
    $region11: #{block_forward.1} parent=5 // pred_region
      %s227 = ssub.s32 %s14, 1
      // Predicated region
      $region13: #{block_forward.1} parent=11 // pred_check
        %p228 = pneg %p61
      $region14: #{block_forward.1} parent=11 // pred_check_branch
        %230 = sbr.rel (%p228) target = $region16
      $region15: #{block_forward.1} parent=11 // pred_region
        _
      $region16: #{block_forward.1} parent=11 // pred_fallthru
        _
      // Predicated region
      $region17: #{block_forward.1} parent=11 // pred_check
        %p231 = pneg %p82
      $region18: #{block_forward.1} parent=11 // pred_check_branch
        %233 = sbr.rel (%p231) target = $region20
      $region19: #{block_forward.1} parent=11 // pred_region
        _
      $region20: #{block_forward.1} parent=11 // pred_fallthru
        _
      // Predicated region
      $region21: #{block_forward.1} parent=11 // pred_check
        %p234 = pneg %p103
      $region22: #{block_forward.1} parent=11 // pred_check_branch
        %236 = sbr.rel (%p234) target = $region24
      $region23: #{block_forward.1} parent=11 // pred_region
        _
      $region24: #{block_forward.1} parent=11 // pred_fallthru
        _
      // Predicated region
      $region25: #{block_forward.1} parent=11 // pred_check
        %p237 = pneg %p124
      $region26: #{block_forward.1} parent=11 // pred_check_branch
        %239 = sbr.rel (%p237) target = $region28
      $region27: #{block_forward.1} parent=11 // pred_region
        _
      $region28: #{block_forward.1} parent=11 // pred_fallthru
        _
      // Predicated region
      $region29: #{block_forward.1} parent=11 // pred_check
        %p240 = pneg %p145
      $region30: #{block_forward.1} parent=11 // pred_check_branch
        %242 = sbr.rel (%p240) target = $region32
      $region31: #{block_forward.1} parent=11 // pred_region
        _
      $region32: #{block_forward.1} parent=11 // pred_fallthru
        _
      // Predicated region
      $region33: #{block_forward.1} parent=11 // pred_check
        %p243 = pneg %p166
      $region34: #{block_forward.1} parent=11 // pred_check_branch
        %245 = sbr.rel (%p243) target = $region36
      $region35: #{block_forward.1} parent=11 // pred_region
        _
      $region36: #{block_forward.1} parent=11 // pred_fallthru
        _
      // Predicated region
      $region37: #{block_forward.1} parent=11 // pred_check
        %p246 = pneg %p187
      $region38: #{block_forward.1} parent=11 // pred_check_branch
        %248 = sbr.rel (%p246) target = $region40
      $region39: #{block_forward.1} parent=11 // pred_region
        _
      $region40: #{block_forward.1} parent=11 // pred_fallthru
        _
    $region12: #{block_forward.1} parent=5 // pred_fallthru
      _
    %p249 = scmp.lt.s32.totalorder %s14, 2
    // Predicated region
    $region41: #{block_forward.1} parent=5 // pred_check
      %p250 = pneg %p249
    $region42: #{block_forward.1} parent=5 // pred_check_branch
      %252 = sbr.rel (%p250) target = $region44
    $region43: #{block_forward.1} parent=5 // pred_region
      // Predicated region
      $region45: #{block_forward.1} parent=43 // pred_check
        %p253 = pneg %p34
      $region46: #{block_forward.1} parent=43 // pred_check_branch
        %255 = sbr.rel (%p253) target = $region48
      $region47: #{block_forward.1} parent=43 // pred_region
        %p256 = scmp.lt.s32.totalorder %s14, 1
        %s257 = scalar_select %p256, %s14, 1
        %s258 = smul.addr %s257, 3
        %s259 = smul.addr %s258, 2
        %s260 = scalar_lea.vmem %s0, %s259
      $region48: #{block_forward.1} parent=43 // pred_fallthru
        _
    $region44: #{block_forward.1} parent=5 // pred_fallthru
      _
    %p261 = scmp.le.s32.totalorder 1, %s14
    %p262 = scmp.lt.s32.totalorder %s14, 3
    %p263 = pnand %p261, %p262
    %p264 = pneg %p263
    // Predicated region
    $region49: #{block_forward.1} parent=5 // pred_check
      _
    $region50: #{block_forward.1} parent=5 // pred_check_branch
      %266 = sbr.rel (%p263) target = $region52
    $region51: #{block_forward.1} parent=5 // pred_region
      %s267 = ssub.s32 %s14, 1
      %p268 = scmp.lt.s32.totalorder %s19, 1
      %s269 = scalar_select %p268, %s19, 1
      %s270 = smul.addr %s269, 3
      %s271 = smul.addr %s270, 2
      %s272 = scalar_lea.vmem %s0, %s271
      %p273 = pneg %p40
      %p274 = pneg %p37
      %p275 = pneg %p61
      %p276 = pneg %p58
      %p277 = pneg %p82
      %p278 = pneg %p79
      %p279 = pneg %p103
      %p280 = pneg %p100
      %p281 = pneg %p124
      %p282 = pneg %p121
      %p283 = pneg %p145
      %p284 = pneg %p142
      %p285 = pneg %p166
      %p286 = pneg %p163
      %p287 = pneg %p187
      %p288 = pneg %p184
      %p289 = pneg %p213
      %p290 = pneg %p210
      %p291 = scmp.lt.s32.totalorder %s19, 1
      %s292 = scalar_select %p291, %s19, 1
      %s293 = smul.addr %s292, 8
      %s294 = scalar_lea.vmem %s8, %s293
      %p295 = scmp.lt.s32.totalorder %s19, 1
      %s296 = scalar_select %p295, %s19, 1
      %s297 = smul.addr %s296, 3
      %s298 = smul.addr %s297, 2
      %s299 = scalar_lea.vmem %s0, %s298
      %p300 = scmp.lt.s32.totalorder %s19, 1
      %s301 = scalar_select %p300, %s19, 1
      %s302 = smul.addr %s301, 8
      %s303 = scalar_lea.vmem %s8, %s302
      %v305 = vld [vmem:[%s299] sm:$0x3f]
      %v306 = vld [vmem:[%s1] sm:$0xf]
      %s307 = scalar_lea.vmem %s1, 4
      %v308 = vld [vmem:[%s307] sm:$0xf]
      %v310 = vcombine.high %v305, %v305
      %v312 = vunpack.c.l.s4 1983009808
      %v313 = vunpack.c.0.s8 %v312
      %v314 = vlaneseq
      %v315 = vshrl.u32 %v314, 7
      %v316 = vsub.s32 %v313, %v315
      %v317 = vrot.slane %v305, %v316
      %v319 = vunpack.c.l.s4 1983009808
      %v320 = vunpack.c.0.s8 %v319
      %v321 = vlaneseq
      %v322 = vshrl.u32 %v321, 7
      %v323 = vsub.s32 %v320, %v322
      %v324 = vrot.slane %v310, %v323
      %v325 = vcombine.high %v317, %v317
      %326 = vrot.lane.b32.xlu0 %v317, 127
      %v327 = vpop.permute.xlu0 %326
      %328 = vrot.lane.b32.xlu0 %v325, 127
      %v329 = vpop.permute.xlu0 %328
      %330 = vrot.lane.b32.xlu0 %v324, 127
      %v331 = vpop.permute.xlu0 %330
      %vm332 = vcmask 1039360
      %v333 = vsel %vm332, %v327, %v329
      %v334 = vsel %vm332, %v329, %v331
      %vm335 = vcmask 31744
      %v337 = vsel %vm335, %v308, 0
      %vm339 = vcmask 1041408
      %v341 = vsel %vm339, %v333, 0
      %v344 = vsel %vm339, %v334, 0
      %v347 = vsel %vm339, %v331, 0
      %349 = vmatprep.subr.bf16.mxu0 0
      %350 = vmatpush1.bf16.msra.mxu0 0
      %351 = vmatprep.subr.bf16.mxu0 0
      %352 = vmatpush1.bf16.msra.mxu0 0
      %353 = vmatprep.subr.bf16.mxu0 0
      %354 = vmatpush1.bf16.msra.mxu0 0
      %355 = vmatprep.subr.bf16.mxu0 0
      %356 = vmatpush1.bf16.msra.mxu0 0
      %357 = vmatprep.subr.bf16.mxu0 0
      %358 = vmatpush1.bf16.msra.mxu0 0
      %359 = vmatprep.subr.bf16.mxu0 0
      %360 = vmatpush1.bf16.msra.mxu0 0
      %361 = vmatprep.subr.bf16.mxu0 0
      %362 = vmatpush1.bf16.msra.mxu0 0
      %363 = vmatprep.subr.bf16.mxu0 %v344
      %364 = vmatpush1.bf16.msra.mxu0 %v341
      %365 = vmatprep.subr.bf16.mxu0 0
      %366 = vmatpush2.bf16.msra.mxu0 0
      %367 = vmatprep.subr.bf16.mxu0 0
      %368 = vmatpush2.bf16.msra.mxu0 0
      %369 = vmatprep.subr.bf16.mxu0 0
      %370 = vmatpush2.bf16.msra.mxu0 0
      %371 = vmatprep.subr.bf16.mxu0 0
      %372 = vmatpush2.bf16.msra.mxu0 0
      %373 = vmatprep.subr.bf16.mxu0 0
      %374 = vmatpush2.bf16.msra.mxu0 0
      %375 = vmatprep.subr.bf16.mxu0 0
      %376 = vmatpush2.bf16.msra.mxu0 0
      %377 = vmatprep.subr.bf16.mxu0 0
      %378 = vmatpush2.bf16.msra.mxu0 0
      %379 = vmatprep.subr.bf16.mxu0 0
      %380 = vmatpush2.bf16.msra.mxu0 0
      %381 = vmatprep.mubr.bf16.mxu0 0
      %382 = vmatmul.mubr.bf16.gmra.mxu0 %v337
      %v383 = vpop.f32.mrf.mxu0
      %v384 = vadd.f32 0.0, %v383
      %v385 = vpop.f32.mrf.mxu0
      %v386 = vadd.f32 0.0, %v385
      %v387 = vpop.f32.mrf.mxu0
      %v388 = vpop.f32.mrf.mxu0
      %389 = vdwg.mxu0
      %390 = vmatprep.subr.bf16.mxu0 0
      %391 = vmatpush1.bf16.msra.mxu0 0
      %392 = vmatprep.subr.bf16.mxu0 0
      %393 = vmatpush1.bf16.msra.mxu0 0
      %394 = vmatprep.subr.bf16.mxu0 0
      %395 = vmatpush1.bf16.msra.mxu0 0
      %396 = vmatprep.subr.bf16.mxu0 0
      %397 = vmatpush1.bf16.msra.mxu0 0
      %398 = vmatprep.subr.bf16.mxu0 0
      %399 = vmatpush1.bf16.msra.mxu0 0
      %400 = vmatprep.subr.bf16.mxu0 0
      %401 = vmatpush1.bf16.msra.mxu0 0
      %402 = vmatprep.subr.bf16.mxu0 0
      %403 = vmatpush1.bf16.msra.mxu0 0
      %404 = vmatprep.subr.bf16.mxu0 0
      %405 = vmatpush1.bf16.msra.mxu0 %v347
      %406 = vmatprep.subr.bf16.mxu0 0
      %407 = vmatpush2.bf16.msra.mxu0 0
      %408 = vmatprep.subr.bf16.mxu0 0
      %409 = vmatpush2.bf16.msra.mxu0 0
      %410 = vmatprep.subr.bf16.mxu0 0
      %411 = vmatpush2.bf16.msra.mxu0 0
      %412 = vmatprep.subr.bf16.mxu0 0
      %413 = vmatpush2.bf16.msra.mxu0 0
      %414 = vmatprep.subr.bf16.mxu0 0
      %415 = vmatpush2.bf16.msra.mxu0 0
      %416 = vmatprep.subr.bf16.mxu0 0
      %417 = vmatpush2.bf16.msra.mxu0 0
      %418 = vmatprep.subr.bf16.mxu0 0
      %419 = vmatpush2.bf16.msra.mxu0 0
      %420 = vmatprep.subr.bf16.mxu0 0
      %421 = vmatpush2.bf16.msra.mxu0 0
      %422 = vmatprep.mubr.bf16.mxu0 0
      %423 = vmatmul.mubr.bf16.gmra.mxu0 %v337
      %v424 = vpop.f32.mrf.mxu0
      %v425 = vadd.f32 0.0, %v424
      %v426 = vpop.f32.mrf.mxu0
      %v427 = vpop.f32.mrf.mxu0
      %v428 = vpop.f32.mrf.mxu0
      %429 = vdwg.mxu0
      %v431 = vsel %vm335, %v306, 0
      %v434 = vsel %vm339, %v317, 0
      %v437 = vsel %vm339, %v325, 0
      %v440 = vsel %vm339, %v324, 0
      %442 = vmatprep.subr.bf16.mxu0 0
      %443 = vmatpush1.bf16.msra.mxu0 0
      %444 = vmatprep.subr.bf16.mxu0 0
      %445 = vmatpush1.bf16.msra.mxu0 0
      %446 = vmatprep.subr.bf16.mxu0 0
      %447 = vmatpush1.bf16.msra.mxu0 0
      %448 = vmatprep.subr.bf16.mxu0 0
      %449 = vmatpush1.bf16.msra.mxu0 0
      %450 = vmatprep.subr.bf16.mxu0 0
      %451 = vmatpush1.bf16.msra.mxu0 0
      %452 = vmatprep.subr.bf16.mxu0 0
      %453 = vmatpush1.bf16.msra.mxu0 0
      %454 = vmatprep.subr.bf16.mxu0 0
      %455 = vmatpush1.bf16.msra.mxu0 0
      %456 = vmatprep.subr.bf16.mxu0 %v437
      %457 = vmatpush1.bf16.msra.mxu0 %v434
      %458 = vmatprep.subr.bf16.mxu0 0
      %459 = vmatpush2.bf16.msra.mxu0 0
      %460 = vmatprep.subr.bf16.mxu0 0
      %461 = vmatpush2.bf16.msra.mxu0 0
      %462 = vmatprep.subr.bf16.mxu0 0
      %463 = vmatpush2.bf16.msra.mxu0 0
      %464 = vmatprep.subr.bf16.mxu0 0
      %465 = vmatpush2.bf16.msra.mxu0 0
      %466 = vmatprep.subr.bf16.mxu0 0
      %467 = vmatpush2.bf16.msra.mxu0 0
      %468 = vmatprep.subr.bf16.mxu0 0
      %469 = vmatpush2.bf16.msra.mxu0 0
      %470 = vmatprep.subr.bf16.mxu0 0
      %471 = vmatpush2.bf16.msra.mxu0 0
      %472 = vmatprep.subr.bf16.mxu0 0
      %473 = vmatpush2.bf16.msra.mxu0 0
      %474 = vmatprep.mubr.bf16.mxu0 0
      %475 = vmatmul.mubr.bf16.gmra.mxu0 %v431
      %v476 = vpop.f32.mrf.mxu0
      %v477 = vadd.f32 %v384, %v476
      %v478 = vpop.f32.mrf.mxu0
      %v479 = vadd.f32 %v386, %v478
      %v480 = vpop.f32.mrf.mxu0
      %v481 = vpop.f32.mrf.mxu0
      %482 = vdwg.mxu0
      %483 = vmatprep.subr.bf16.mxu0 0
      %484 = vmatpush1.bf16.msra.mxu0 0
      %485 = vmatprep.subr.bf16.mxu0 0
      %486 = vmatpush1.bf16.msra.mxu0 0
      %487 = vmatprep.subr.bf16.mxu0 0
      %488 = vmatpush1.bf16.msra.mxu0 0
      %489 = vmatprep.subr.bf16.mxu0 0
      %490 = vmatpush1.bf16.msra.mxu0 0
      %491 = vmatprep.subr.bf16.mxu0 0
      %492 = vmatpush1.bf16.msra.mxu0 0
      %493 = vmatprep.subr.bf16.mxu0 0
      %494 = vmatpush1.bf16.msra.mxu0 0
      %495 = vmatprep.subr.bf16.mxu0 0
      %496 = vmatpush1.bf16.msra.mxu0 0
      %497 = vmatprep.subr.bf16.mxu0 0
      %498 = vmatpush1.bf16.msra.mxu0 %v440
      %499 = vmatprep.subr.bf16.mxu0 0
      %500 = vmatpush2.bf16.msra.mxu0 0
      %501 = vmatprep.subr.bf16.mxu0 0
      %502 = vmatpush2.bf16.msra.mxu0 0
      %503 = vmatprep.subr.bf16.mxu0 0
      %504 = vmatpush2.bf16.msra.mxu0 0
      %505 = vmatprep.subr.bf16.mxu0 0
      %506 = vmatpush2.bf16.msra.mxu0 0
      %507 = vmatprep.subr.bf16.mxu0 0
      %508 = vmatpush2.bf16.msra.mxu0 0
      %509 = vmatprep.subr.bf16.mxu0 0
      %510 = vmatpush2.bf16.msra.mxu0 0
      %511 = vmatprep.subr.bf16.mxu0 0
      %512 = vmatpush2.bf16.msra.mxu0 0
      %513 = vmatprep.subr.bf16.mxu0 0
      %514 = vmatpush2.bf16.msra.mxu0 0
      %515 = vmatprep.mubr.bf16.mxu0 0
      %516 = vmatmul.mubr.bf16.gmra.mxu0 %v431
      %v517 = vpop.f32.mrf.mxu0
      %v518 = vadd.f32 %v425, %v517
      %v519 = vpop.f32.mrf.mxu0
      %v520 = vpop.f32.mrf.mxu0
      %v521 = vpop.f32.mrf.mxu0
      %522 = vdwg.mxu0
      %s523 = scalar_lea.vmem %s1, 8
      %v524 = vld [vmem:[%s523] sm:$0xf]
      %525 = vrot.lane.b32.xlu0 %v317, 126
      %v526 = vpop.permute.xlu0 %525
      %527 = vrot.lane.b32.xlu0 %v325, 126
      %v528 = vpop.permute.xlu0 %527
      %529 = vrot.lane.b32.xlu0 %v324, 126
      %v530 = vpop.permute.xlu0 %529
      %vm531 = vcmask 1031168
      %v532 = vsel %vm531, %v526, %v528
      %v533 = vsel %vm531, %v528, %v530
      %v535 = vsel %vm335, %v524, 0
      %v538 = vsel %vm339, %v532, 0
      %v541 = vsel %vm339, %v533, 0
      %v544 = vsel %vm339, %v530, 0
      %546 = vmatprep.subr.bf16.mxu0 0
      %547 = vmatpush1.bf16.msra.mxu0 0
      %548 = vmatprep.subr.bf16.mxu0 0
      %549 = vmatpush1.bf16.msra.mxu0 0
      %550 = vmatprep.subr.bf16.mxu0 0
      %551 = vmatpush1.bf16.msra.mxu0 0
      %552 = vmatprep.subr.bf16.mxu0 0
      %553 = vmatpush1.bf16.msra.mxu0 0
      %554 = vmatprep.subr.bf16.mxu0 0
      %555 = vmatpush1.bf16.msra.mxu0 0
      %556 = vmatprep.subr.bf16.mxu0 0
      %557 = vmatpush1.bf16.msra.mxu0 0
      %558 = vmatprep.subr.bf16.mxu0 0
      %559 = vmatpush1.bf16.msra.mxu0 0
      %560 = vmatprep.subr.bf16.mxu0 %v541
      %561 = vmatpush1.bf16.msra.mxu0 %v538
      %562 = vmatprep.subr.bf16.mxu0 0
      %563 = vmatpush2.bf16.msra.mxu0 0
      %564 = vmatprep.subr.bf16.mxu0 0
      %565 = vmatpush2.bf16.msra.mxu0 0
      %566 = vmatprep.subr.bf16.mxu0 0
      %567 = vmatpush2.bf16.msra.mxu0 0
      %568 = vmatprep.subr.bf16.mxu0 0
      %569 = vmatpush2.bf16.msra.mxu0 0
      %570 = vmatprep.subr.bf16.mxu0 0
      %571 = vmatpush2.bf16.msra.mxu0 0
      %572 = vmatprep.subr.bf16.mxu0 0
      %573 = vmatpush2.bf16.msra.mxu0 0
      %574 = vmatprep.subr.bf16.mxu0 0
      %575 = vmatpush2.bf16.msra.mxu0 0
      %576 = vmatprep.subr.bf16.mxu0 0
      %577 = vmatpush2.bf16.msra.mxu0 0
      %578 = vmatprep.mubr.bf16.mxu0 0
      %579 = vmatmul.mubr.bf16.gmra.mxu0 %v535
      %v580 = vpop.f32.mrf.mxu0
      %v581 = vadd.f32 0.0, %v580
      %v582 = vpop.f32.mrf.mxu0
      %v583 = vadd.f32 0.0, %v582
      %v584 = vpop.f32.mrf.mxu0
      %v585 = vpop.f32.mrf.mxu0
      %586 = vdwg.mxu0
      %587 = vmatprep.subr.bf16.mxu0 0
      %588 = vmatpush1.bf16.msra.mxu0 0
      %589 = vmatprep.subr.bf16.mxu0 0
      %590 = vmatpush1.bf16.msra.mxu0 0
      %591 = vmatprep.subr.bf16.mxu0 0
      %592 = vmatpush1.bf16.msra.mxu0 0
      %593 = vmatprep.subr.bf16.mxu0 0
      %594 = vmatpush1.bf16.msra.mxu0 0
      %595 = vmatprep.subr.bf16.mxu0 0
      %596 = vmatpush1.bf16.msra.mxu0 0
      %597 = vmatprep.subr.bf16.mxu0 0
      %598 = vmatpush1.bf16.msra.mxu0 0
      %599 = vmatprep.subr.bf16.mxu0 0
      %600 = vmatpush1.bf16.msra.mxu0 0
      %601 = vmatprep.subr.bf16.mxu0 0
      %602 = vmatpush1.bf16.msra.mxu0 %v544
      %603 = vmatprep.subr.bf16.mxu0 0
      %604 = vmatpush2.bf16.msra.mxu0 0
      %605 = vmatprep.subr.bf16.mxu0 0
      %606 = vmatpush2.bf16.msra.mxu0 0
      %607 = vmatprep.subr.bf16.mxu0 0
      %608 = vmatpush2.bf16.msra.mxu0 0
      %609 = vmatprep.subr.bf16.mxu0 0
      %610 = vmatpush2.bf16.msra.mxu0 0
      %611 = vmatprep.subr.bf16.mxu0 0
      %612 = vmatpush2.bf16.msra.mxu0 0
      %613 = vmatprep.subr.bf16.mxu0 0
      %614 = vmatpush2.bf16.msra.mxu0 0
      %615 = vmatprep.subr.bf16.mxu0 0
      %616 = vmatpush2.bf16.msra.mxu0 0
      %617 = vmatprep.subr.bf16.mxu0 0
      %618 = vmatpush2.bf16.msra.mxu0 0
      %619 = vmatprep.mubr.bf16.mxu0 0
      %620 = vmatmul.mubr.bf16.gmra.mxu0 %v535
      %v621 = vpop.f32.mrf.mxu0
      %v622 = vadd.f32 0.0, %v621
      %v623 = vpop.f32.mrf.mxu0
      %v624 = vpop.f32.mrf.mxu0
      %v625 = vpop.f32.mrf.mxu0
      %626 = vdwg.mxu0
      %v627 = vadd.f32 %v477, %v581
      %v628 = vadd.f32 %v479, %v583
      %v629 = vadd.f32 %v518, %v622
      %s630 = scalar_lea.vmem %s1, 12
      %v631 = vld [vmem:[%s630] sm:$0xf]
      %632 = vrot.lane.b32.xlu0 %v317, 110
      %v633 = vpop.permute.xlu0 %632
      %634 = vrot.lane.b32.xlu0 %v325, 110
      %v635 = vpop.permute.xlu0 %634
      %636 = vrot.lane.b32.xlu0 %v324, 110
      %v637 = vpop.permute.xlu0 %636
      %vm638 = vcmask 900096
      %v639 = vsel %vm638, %v633, %v635
      %v640 = vsel %vm638, %v635, %v637
      %v642 = vsel %vm335, %v631, 0
      %v645 = vsel %vm339, %v639, 0
      %v648 = vsel %vm339, %v640, 0
      %v651 = vsel %vm339, %v637, 0
      %653 = vmatprep.subr.bf16.mxu0 0
      %654 = vmatpush1.bf16.msra.mxu0 0
      %655 = vmatprep.subr.bf16.mxu0 0
      %656 = vmatpush1.bf16.msra.mxu0 0
      %657 = vmatprep.subr.bf16.mxu0 0
      %658 = vmatpush1.bf16.msra.mxu0 0
      %659 = vmatprep.subr.bf16.mxu0 0
      %660 = vmatpush1.bf16.msra.mxu0 0
      %661 = vmatprep.subr.bf16.mxu0 0
      %662 = vmatpush1.bf16.msra.mxu0 0
      %663 = vmatprep.subr.bf16.mxu0 0
      %664 = vmatpush1.bf16.msra.mxu0 0
      %665 = vmatprep.subr.bf16.mxu0 0
      %666 = vmatpush1.bf16.msra.mxu0 0
      %667 = vmatprep.subr.bf16.mxu0 %v648
      %668 = vmatpush1.bf16.msra.mxu0 %v645
      %669 = vmatprep.subr.bf16.mxu0 0
      %670 = vmatpush2.bf16.msra.mxu0 0
      %671 = vmatprep.subr.bf16.mxu0 0
      %672 = vmatpush2.bf16.msra.mxu0 0
      %673 = vmatprep.subr.bf16.mxu0 0
      %674 = vmatpush2.bf16.msra.mxu0 0
      %675 = vmatprep.subr.bf16.mxu0 0
      %676 = vmatpush2.bf16.msra.mxu0 0
      %677 = vmatprep.subr.bf16.mxu0 0
      %678 = vmatpush2.bf16.msra.mxu0 0
      %679 = vmatprep.subr.bf16.mxu0 0
      %680 = vmatpush2.bf16.msra.mxu0 0
      %681 = vmatprep.subr.bf16.mxu0 0
      %682 = vmatpush2.bf16.msra.mxu0 0
      %683 = vmatprep.subr.bf16.mxu0 0
      %684 = vmatpush2.bf16.msra.mxu0 0
      %685 = vmatprep.mubr.bf16.mxu0 0
      %686 = vmatmul.mubr.bf16.gmra.mxu0 %v642
      %v687 = vpop.f32.mrf.mxu0
      %v688 = vadd.f32 0.0, %v687
      %v689 = vpop.f32.mrf.mxu0
      %v690 = vadd.f32 0.0, %v689
      %v691 = vpop.f32.mrf.mxu0
      %v692 = vpop.f32.mrf.mxu0
      %693 = vdwg.mxu0
      %694 = vmatprep.subr.bf16.mxu0 0
      %695 = vmatpush1.bf16.msra.mxu0 0
      %696 = vmatprep.subr.bf16.mxu0 0
      %697 = vmatpush1.bf16.msra.mxu0 0
      %698 = vmatprep.subr.bf16.mxu0 0
      %699 = vmatpush1.bf16.msra.mxu0 0
      %700 = vmatprep.subr.bf16.mxu0 0
      %701 = vmatpush1.bf16.msra.mxu0 0
      %702 = vmatprep.subr.bf16.mxu0 0
      %703 = vmatpush1.bf16.msra.mxu0 0
      %704 = vmatprep.subr.bf16.mxu0 0
      %705 = vmatpush1.bf16.msra.mxu0 0
      %706 = vmatprep.subr.bf16.mxu0 0
      %707 = vmatpush1.bf16.msra.mxu0 0
      %708 = vmatprep.subr.bf16.mxu0 0
      %709 = vmatpush1.bf16.msra.mxu0 %v651
      %710 = vmatprep.subr.bf16.mxu0 0
      %711 = vmatpush2.bf16.msra.mxu0 0
      %712 = vmatprep.subr.bf16.mxu0 0
      %713 = vmatpush2.bf16.msra.mxu0 0
      %714 = vmatprep.subr.bf16.mxu0 0
      %715 = vmatpush2.bf16.msra.mxu0 0
      %716 = vmatprep.subr.bf16.mxu0 0
      %717 = vmatpush2.bf16.msra.mxu0 0
      %718 = vmatprep.subr.bf16.mxu0 0
      %719 = vmatpush2.bf16.msra.mxu0 0
      %720 = vmatprep.subr.bf16.mxu0 0
      %721 = vmatpush2.bf16.msra.mxu0 0
      %722 = vmatprep.subr.bf16.mxu0 0
      %723 = vmatpush2.bf16.msra.mxu0 0
      %724 = vmatprep.subr.bf16.mxu0 0
      %725 = vmatpush2.bf16.msra.mxu0 0
      %726 = vmatprep.mubr.bf16.mxu0 0
      %727 = vmatmul.mubr.bf16.gmra.mxu0 %v642
      %v728 = vpop.f32.mrf.mxu0
      %v729 = vadd.f32 0.0, %v728
      %v730 = vpop.f32.mrf.mxu0
      %v731 = vpop.f32.mrf.mxu0
      %v732 = vpop.f32.mrf.mxu0
      %733 = vdwg.mxu0
      %v734 = vadd.f32 %v627, %v688
      %v735 = vadd.f32 %v628, %v690
      %v736 = vadd.f32 %v629, %v729
      %s737 = scalar_lea.vmem %s1, 16
      %v738 = vld [vmem:[%s737] sm:$0xf]
      %739 = vrot.lane.b32.xlu0 %v317, 109
      %v740 = vpop.permute.xlu0 %739
      %741 = vrot.lane.b32.xlu0 %v325, 109
      %v742 = vpop.permute.xlu0 %741
      %743 = vrot.lane.b32.xlu0 %v324, 109
      %v744 = vpop.permute.xlu0 %743
      %vm745 = vcmask 891904
      %v746 = vsel %vm745, %v740, %v742
      %v747 = vsel %vm745, %v742, %v744
      %v749 = vsel %vm335, %v738, 0
      %v752 = vsel %vm339, %v746, 0
      %v755 = vsel %vm339, %v747, 0
      %v758 = vsel %vm339, %v744, 0
      %760 = vmatprep.subr.bf16.mxu0 0
      %761 = vmatpush1.bf16.msra.mxu0 0
      %762 = vmatprep.subr.bf16.mxu0 0
      %763 = vmatpush1.bf16.msra.mxu0 0
      %764 = vmatprep.subr.bf16.mxu0 0
      %765 = vmatpush1.bf16.msra.mxu0 0
      %766 = vmatprep.subr.bf16.mxu0 0
      %767 = vmatpush1.bf16.msra.mxu0 0
      %768 = vmatprep.subr.bf16.mxu0 0
      %769 = vmatpush1.bf16.msra.mxu0 0
      %770 = vmatprep.subr.bf16.mxu0 0
      %771 = vmatpush1.bf16.msra.mxu0 0
      %772 = vmatprep.subr.bf16.mxu0 0
      %773 = vmatpush1.bf16.msra.mxu0 0
      %774 = vmatprep.subr.bf16.mxu0 %v755
      %775 = vmatpush1.bf16.msra.mxu0 %v752
      %776 = vmatprep.subr.bf16.mxu0 0
      %777 = vmatpush2.bf16.msra.mxu0 0
      %778 = vmatprep.subr.bf16.mxu0 0
      %779 = vmatpush2.bf16.msra.mxu0 0
      %780 = vmatprep.subr.bf16.mxu0 0
      %781 = vmatpush2.bf16.msra.mxu0 0
      %782 = vmatprep.subr.bf16.mxu0 0
      %783 = vmatpush2.bf16.msra.mxu0 0
      %784 = vmatprep.subr.bf16.mxu0 0
      %785 = vmatpush2.bf16.msra.mxu0 0
      %786 = vmatprep.subr.bf16.mxu0 0
      %787 = vmatpush2.bf16.msra.mxu0 0
      %788 = vmatprep.subr.bf16.mxu0 0
      %789 = vmatpush2.bf16.msra.mxu0 0
      %790 = vmatprep.subr.bf16.mxu0 0
      %791 = vmatpush2.bf16.msra.mxu0 0
      %792 = vmatprep.mubr.bf16.mxu0 0
      %793 = vmatmul.mubr.bf16.gmra.mxu0 %v749
      %v794 = vpop.f32.mrf.mxu0
      %v795 = vadd.f32 0.0, %v794
      %v796 = vpop.f32.mrf.mxu0
      %v797 = vadd.f32 0.0, %v796
      %v798 = vpop.f32.mrf.mxu0
      %v799 = vpop.f32.mrf.mxu0
      %800 = vdwg.mxu0
      %801 = vmatprep.subr.bf16.mxu0 0
      %802 = vmatpush1.bf16.msra.mxu0 0
      %803 = vmatprep.subr.bf16.mxu0 0
      %804 = vmatpush1.bf16.msra.mxu0 0
      %805 = vmatprep.subr.bf16.mxu0 0
      %806 = vmatpush1.bf16.msra.mxu0 0
      %807 = vmatprep.subr.bf16.mxu0 0
      %808 = vmatpush1.bf16.msra.mxu0 0
      %809 = vmatprep.subr.bf16.mxu0 0
      %810 = vmatpush1.bf16.msra.mxu0 0
      %811 = vmatprep.subr.bf16.mxu0 0
      %812 = vmatpush1.bf16.msra.mxu0 0
      %813 = vmatprep.subr.bf16.mxu0 0
      %814 = vmatpush1.bf16.msra.mxu0 0
      %815 = vmatprep.subr.bf16.mxu0 0
      %816 = vmatpush1.bf16.msra.mxu0 %v758
      %817 = vmatprep.subr.bf16.mxu0 0
      %818 = vmatpush2.bf16.msra.mxu0 0
      %819 = vmatprep.subr.bf16.mxu0 0
      %820 = vmatpush2.bf16.msra.mxu0 0
      %821 = vmatprep.subr.bf16.mxu0 0
      %822 = vmatpush2.bf16.msra.mxu0 0
      %823 = vmatprep.subr.bf16.mxu0 0
      %824 = vmatpush2.bf16.msra.mxu0 0
      %825 = vmatprep.subr.bf16.mxu0 0
      %826 = vmatpush2.bf16.msra.mxu0 0
      %827 = vmatprep.subr.bf16.mxu0 0
      %828 = vmatpush2.bf16.msra.mxu0 0
      %829 = vmatprep.subr.bf16.mxu0 0
      %830 = vmatpush2.bf16.msra.mxu0 0
      %831 = vmatprep.subr.bf16.mxu0 0
      %832 = vmatpush2.bf16.msra.mxu0 0
      %833 = vmatprep.mubr.bf16.mxu0 0
      %834 = vmatmul.mubr.bf16.gmra.mxu0 %v749
      %v835 = vpop.f32.mrf.mxu0
      %v836 = vadd.f32 0.0, %v835
      %v837 = vpop.f32.mrf.mxu0
      %v838 = vpop.f32.mrf.mxu0
      %v839 = vpop.f32.mrf.mxu0
      %840 = vdwg.mxu0
      %v841 = vadd.f32 %v734, %v795
      %v842 = vadd.f32 %v735, %v797
      %v843 = vadd.f32 %v736, %v836
      %s844 = scalar_lea.vmem %s1, 20
      %v845 = vld [vmem:[%s844] sm:$0xf]
      %846 = vrot.lane.b32.xlu0 %v317, 108
      %v847 = vpop.permute.xlu0 %846
      %848 = vrot.lane.b32.xlu0 %v325, 108
      %v849 = vpop.permute.xlu0 %848
      %850 = vrot.lane.b32.xlu0 %v324, 108
      %v851 = vpop.permute.xlu0 %850
      %vm852 = vcmask 883712
      %v853 = vsel %vm852, %v847, %v849
      %v854 = vsel %vm852, %v849, %v851
      %v856 = vsel %vm335, %v845, 0
      %v859 = vsel %vm339, %v853, 0
      %v862 = vsel %vm339, %v854, 0
      %v865 = vsel %vm339, %v851, 0
      %867 = vmatprep.subr.bf16.mxu0 0
      %868 = vmatpush1.bf16.msra.mxu0 0
      %869 = vmatprep.subr.bf16.mxu0 0
      %870 = vmatpush1.bf16.msra.mxu0 0
      %871 = vmatprep.subr.bf16.mxu0 0
      %872 = vmatpush1.bf16.msra.mxu0 0
      %873 = vmatprep.subr.bf16.mxu0 0
      %874 = vmatpush1.bf16.msra.mxu0 0
      %875 = vmatprep.subr.bf16.mxu0 0
      %876 = vmatpush1.bf16.msra.mxu0 0
      %877 = vmatprep.subr.bf16.mxu0 0
      %878 = vmatpush1.bf16.msra.mxu0 0
      %879 = vmatprep.subr.bf16.mxu0 0
      %880 = vmatpush1.bf16.msra.mxu0 0
      %881 = vmatprep.subr.bf16.mxu0 %v862
      %882 = vmatpush1.bf16.msra.mxu0 %v859
      %883 = vmatprep.subr.bf16.mxu0 0
      %884 = vmatpush2.bf16.msra.mxu0 0
      %885 = vmatprep.subr.bf16.mxu0 0
      %886 = vmatpush2.bf16.msra.mxu0 0
      %887 = vmatprep.subr.bf16.mxu0 0
      %888 = vmatpush2.bf16.msra.mxu0 0
      %889 = vmatprep.subr.bf16.mxu0 0
      %890 = vmatpush2.bf16.msra.mxu0 0
      %891 = vmatprep.subr.bf16.mxu0 0
      %892 = vmatpush2.bf16.msra.mxu0 0
      %893 = vmatprep.subr.bf16.mxu0 0
      %894 = vmatpush2.bf16.msra.mxu0 0
      %895 = vmatprep.subr.bf16.mxu0 0
      %896 = vmatpush2.bf16.msra.mxu0 0
      %897 = vmatprep.subr.bf16.mxu0 0
      %898 = vmatpush2.bf16.msra.mxu0 0
      %899 = vmatprep.mubr.bf16.mxu0 0
      %900 = vmatmul.mubr.bf16.gmra.mxu0 %v856
      %v901 = vpop.f32.mrf.mxu0
      %v902 = vadd.f32 0.0, %v901
      %v903 = vpop.f32.mrf.mxu0
      %v904 = vadd.f32 0.0, %v903
      %v905 = vpop.f32.mrf.mxu0
      %v906 = vpop.f32.mrf.mxu0
      %907 = vdwg.mxu0
      %908 = vmatprep.subr.bf16.mxu0 0
      %909 = vmatpush1.bf16.msra.mxu0 0
      %910 = vmatprep.subr.bf16.mxu0 0
      %911 = vmatpush1.bf16.msra.mxu0 0
      %912 = vmatprep.subr.bf16.mxu0 0
      %913 = vmatpush1.bf16.msra.mxu0 0
      %914 = vmatprep.subr.bf16.mxu0 0
      %915 = vmatpush1.bf16.msra.mxu0 0
      %916 = vmatprep.subr.bf16.mxu0 0
      %917 = vmatpush1.bf16.msra.mxu0 0
      %918 = vmatprep.subr.bf16.mxu0 0
      %919 = vmatpush1.bf16.msra.mxu0 0
      %920 = vmatprep.subr.bf16.mxu0 0
      %921 = vmatpush1.bf16.msra.mxu0 0
      %922 = vmatprep.subr.bf16.mxu0 0
      %923 = vmatpush1.bf16.msra.mxu0 %v865
      %924 = vmatprep.subr.bf16.mxu0 0
      %925 = vmatpush2.bf16.msra.mxu0 0
      %926 = vmatprep.subr.bf16.mxu0 0
      %927 = vmatpush2.bf16.msra.mxu0 0
      %928 = vmatprep.subr.bf16.mxu0 0
      %929 = vmatpush2.bf16.msra.mxu0 0
      %930 = vmatprep.subr.bf16.mxu0 0
      %931 = vmatpush2.bf16.msra.mxu0 0
      %932 = vmatprep.subr.bf16.mxu0 0
      %933 = vmatpush2.bf16.msra.mxu0 0
      %934 = vmatprep.subr.bf16.mxu0 0
      %935 = vmatpush2.bf16.msra.mxu0 0
      %936 = vmatprep.subr.bf16.mxu0 0
      %937 = vmatpush2.bf16.msra.mxu0 0
      %938 = vmatprep.subr.bf16.mxu0 0
      %939 = vmatpush2.bf16.msra.mxu0 0
      %940 = vmatprep.mubr.bf16.mxu0 0
      %941 = vmatmul.mubr.bf16.gmra.mxu0 %v856
      %v942 = vpop.f32.mrf.mxu0
      %v943 = vadd.f32 0.0, %v942
      %v944 = vpop.f32.mrf.mxu0
      %v945 = vpop.f32.mrf.mxu0
      %v946 = vpop.f32.mrf.mxu0
      %947 = vdwg.mxu0
      %v948 = vadd.f32 %v841, %v902
      %v949 = vadd.f32 %v842, %v904
      %v950 = vadd.f32 %v843, %v943
      %s951 = scalar_lea.vmem %s1, 24
      %v952 = vld [vmem:[%s951] sm:$0xf]
      %953 = vrot.lane.b32.xlu0 %v317, 92
      %v954 = vpop.permute.xlu0 %953
      %955 = vrot.lane.b32.xlu0 %v325, 92
      %v956 = vpop.permute.xlu0 %955
      %957 = vrot.lane.b32.xlu0 %v324, 92
      %v958 = vpop.permute.xlu0 %957
      %vm959 = vcmask 752640
      %v960 = vsel %vm959, %v954, %v956
      %v961 = vsel %vm959, %v956, %v958
      %v963 = vsel %vm335, %v952, 0
      %v966 = vsel %vm339, %v960, 0
      %v969 = vsel %vm339, %v961, 0
      %v972 = vsel %vm339, %v958, 0
      %974 = vmatprep.subr.bf16.mxu0 0
      %975 = vmatpush1.bf16.msra.mxu0 0
      %976 = vmatprep.subr.bf16.mxu0 0
      %977 = vmatpush1.bf16.msra.mxu0 0
      %978 = vmatprep.subr.bf16.mxu0 0
      %979 = vmatpush1.bf16.msra.mxu0 0
      %980 = vmatprep.subr.bf16.mxu0 0
      %981 = vmatpush1.bf16.msra.mxu0 0
      %982 = vmatprep.subr.bf16.mxu0 0
      %983 = vmatpush1.bf16.msra.mxu0 0
      %984 = vmatprep.subr.bf16.mxu0 0
      %985 = vmatpush1.bf16.msra.mxu0 0
      %986 = vmatprep.subr.bf16.mxu0 0
      %987 = vmatpush1.bf16.msra.mxu0 0
      %988 = vmatprep.subr.bf16.mxu0 %v969
      %989 = vmatpush1.bf16.msra.mxu0 %v966
      %990 = vmatprep.subr.bf16.mxu0 0
      %991 = vmatpush2.bf16.msra.mxu0 0
      %992 = vmatprep.subr.bf16.mxu0 0
      %993 = vmatpush2.bf16.msra.mxu0 0
      %994 = vmatprep.subr.bf16.mxu0 0
      %995 = vmatpush2.bf16.msra.mxu0 0
      %996 = vmatprep.subr.bf16.mxu0 0
      %997 = vmatpush2.bf16.msra.mxu0 0
      %998 = vmatprep.subr.bf16.mxu0 0
      %999 = vmatpush2.bf16.msra.mxu0 0
      %1000 = vmatprep.subr.bf16.mxu0 0
      %1001 = vmatpush2.bf16.msra.mxu0 0
      %1002 = vmatprep.subr.bf16.mxu0 0
      %1003 = vmatpush2.bf16.msra.mxu0 0
      %1004 = vmatprep.subr.bf16.mxu0 0
      %1005 = vmatpush2.bf16.msra.mxu0 0
      %1006 = vmatprep.mubr.bf16.mxu0 0
      %1007 = vmatmul.mubr.bf16.gmra.mxu0 %v963
      %v1008 = vpop.f32.mrf.mxu0
      %v1009 = vadd.f32 0.0, %v1008
      %v1010 = vpop.f32.mrf.mxu0
      %v1011 = vadd.f32 0.0, %v1010
      %v1012 = vpop.f32.mrf.mxu0
      %v1013 = vpop.f32.mrf.mxu0
      %1014 = vdwg.mxu0
      %1015 = vmatprep.subr.bf16.mxu0 0
      %1016 = vmatpush1.bf16.msra.mxu0 0
      %1017 = vmatprep.subr.bf16.mxu0 0
      %1018 = vmatpush1.bf16.msra.mxu0 0
      %1019 = vmatprep.subr.bf16.mxu0 0
      %1020 = vmatpush1.bf16.msra.mxu0 0
      %1021 = vmatprep.subr.bf16.mxu0 0
      %1022 = vmatpush1.bf16.msra.mxu0 0
      %1023 = vmatprep.subr.bf16.mxu0 0
      %1024 = vmatpush1.bf16.msra.mxu0 0
      %1025 = vmatprep.subr.bf16.mxu0 0
      %1026 = vmatpush1.bf16.msra.mxu0 0
      %1027 = vmatprep.subr.bf16.mxu0 0
      %1028 = vmatpush1.bf16.msra.mxu0 0
      %1029 = vmatprep.subr.bf16.mxu0 0
      %1030 = vmatpush1.bf16.msra.mxu0 %v972
      %1031 = vmatprep.subr.bf16.mxu0 0
      %1032 = vmatpush2.bf16.msra.mxu0 0
      %1033 = vmatprep.subr.bf16.mxu0 0
      %1034 = vmatpush2.bf16.msra.mxu0 0
      %1035 = vmatprep.subr.bf16.mxu0 0
      %1036 = vmatpush2.bf16.msra.mxu0 0
      %1037 = vmatprep.subr.bf16.mxu0 0
      %1038 = vmatpush2.bf16.msra.mxu0 0
      %1039 = vmatprep.subr.bf16.mxu0 0
      %1040 = vmatpush2.bf16.msra.mxu0 0
      %1041 = vmatprep.subr.bf16.mxu0 0
      %1042 = vmatpush2.bf16.msra.mxu0 0
      %1043 = vmatprep.subr.bf16.mxu0 0
      %1044 = vmatpush2.bf16.msra.mxu0 0
      %1045 = vmatprep.subr.bf16.mxu0 0
      %1046 = vmatpush2.bf16.msra.mxu0 0
      %1047 = vmatprep.mubr.bf16.mxu0 0
      %1048 = vmatmul.mubr.bf16.gmra.mxu0 %v963
      %v1049 = vpop.f32.mrf.mxu0
      %v1050 = vadd.f32 0.0, %v1049
      %v1051 = vpop.f32.mrf.mxu0
      %v1052 = vpop.f32.mrf.mxu0
      %v1053 = vpop.f32.mrf.mxu0
      %1054 = vdwg.mxu0
      %v1055 = vadd.f32 %v948, %v1009
      %v1056 = vadd.f32 %v949, %v1011
      %v1057 = vadd.f32 %v950, %v1050
      %s1058 = scalar_lea.vmem %s1, 28
      %v1059 = vld [vmem:[%s1058] sm:$0xf]
      %1060 = vrot.lane.b32.xlu0 %v317, 91
      %v1061 = vpop.permute.xlu0 %1060
      %1062 = vrot.lane.b32.xlu0 %v325, 91
      %v1063 = vpop.permute.xlu0 %1062
      %1064 = vrot.lane.b32.xlu0 %v324, 91
      %v1065 = vpop.permute.xlu0 %1064
      %vm1066 = vcmask 744448
      %v1067 = vsel %vm1066, %v1061, %v1063
      %v1068 = vsel %vm1066, %v1063, %v1065
      %v1070 = vsel %vm335, %v1059, 0
      %v1073 = vsel %vm339, %v1067, 0
      %v1076 = vsel %vm339, %v1068, 0
      %v1079 = vsel %vm339, %v1065, 0
      %1081 = vmatprep.subr.bf16.mxu0 0
      %1082 = vmatpush1.bf16.msra.mxu0 0
      %1083 = vmatprep.subr.bf16.mxu0 0
      %1084 = vmatpush1.bf16.msra.mxu0 0
      %1085 = vmatprep.subr.bf16.mxu0 0
      %1086 = vmatpush1.bf16.msra.mxu0 0
      %1087 = vmatprep.subr.bf16.mxu0 0
      %1088 = vmatpush1.bf16.msra.mxu0 0
      %1089 = vmatprep.subr.bf16.mxu0 0
      %1090 = vmatpush1.bf16.msra.mxu0 0
      %1091 = vmatprep.subr.bf16.mxu0 0
      %1092 = vmatpush1.bf16.msra.mxu0 0
      %1093 = vmatprep.subr.bf16.mxu0 0
      %1094 = vmatpush1.bf16.msra.mxu0 0
      %1095 = vmatprep.subr.bf16.mxu0 %v1076
      %1096 = vmatpush1.bf16.msra.mxu0 %v1073
      %1097 = vmatprep.subr.bf16.mxu0 0
      %1098 = vmatpush2.bf16.msra.mxu0 0
      %1099 = vmatprep.subr.bf16.mxu0 0
      %1100 = vmatpush2.bf16.msra.mxu0 0
      %1101 = vmatprep.subr.bf16.mxu0 0
      %1102 = vmatpush2.bf16.msra.mxu0 0
      %1103 = vmatprep.subr.bf16.mxu0 0
      %1104 = vmatpush2.bf16.msra.mxu0 0
      %1105 = vmatprep.subr.bf16.mxu0 0
      %1106 = vmatpush2.bf16.msra.mxu0 0
      %1107 = vmatprep.subr.bf16.mxu0 0
      %1108 = vmatpush2.bf16.msra.mxu0 0
      %1109 = vmatprep.subr.bf16.mxu0 0
      %1110 = vmatpush2.bf16.msra.mxu0 0
      %1111 = vmatprep.subr.bf16.mxu0 0
      %1112 = vmatpush2.bf16.msra.mxu0 0
      %1113 = vmatprep.mubr.bf16.mxu0 0
      %1114 = vmatmul.mubr.bf16.gmra.mxu0 %v1070
      %v1115 = vpop.f32.mrf.mxu0
      %v1116 = vadd.f32 0.0, %v1115
      %v1117 = vpop.f32.mrf.mxu0
      %v1118 = vadd.f32 0.0, %v1117
      %v1119 = vpop.f32.mrf.mxu0
      %v1120 = vpop.f32.mrf.mxu0
      %1121 = vdwg.mxu0
      %1122 = vmatprep.subr.bf16.mxu0 0
      %1123 = vmatpush1.bf16.msra.mxu0 0
      %1124 = vmatprep.subr.bf16.mxu0 0
      %1125 = vmatpush1.bf16.msra.mxu0 0
      %1126 = vmatprep.subr.bf16.mxu0 0
      %1127 = vmatpush1.bf16.msra.mxu0 0
      %1128 = vmatprep.subr.bf16.mxu0 0
      %1129 = vmatpush1.bf16.msra.mxu0 0
      %1130 = vmatprep.subr.bf16.mxu0 0
      %1131 = vmatpush1.bf16.msra.mxu0 0
      %1132 = vmatprep.subr.bf16.mxu0 0
      %1133 = vmatpush1.bf16.msra.mxu0 0
      %1134 = vmatprep.subr.bf16.mxu0 0
      %1135 = vmatpush1.bf16.msra.mxu0 0
      %1136 = vmatprep.subr.bf16.mxu0 0
      %1137 = vmatpush1.bf16.msra.mxu0 %v1079
      %1138 = vmatprep.subr.bf16.mxu0 0
      %1139 = vmatpush2.bf16.msra.mxu0 0
      %1140 = vmatprep.subr.bf16.mxu0 0
      %1141 = vmatpush2.bf16.msra.mxu0 0
      %1142 = vmatprep.subr.bf16.mxu0 0
      %1143 = vmatpush2.bf16.msra.mxu0 0
      %1144 = vmatprep.subr.bf16.mxu0 0
      %1145 = vmatpush2.bf16.msra.mxu0 0
      %1146 = vmatprep.subr.bf16.mxu0 0
      %1147 = vmatpush2.bf16.msra.mxu0 0
      %1148 = vmatprep.subr.bf16.mxu0 0
      %1149 = vmatpush2.bf16.msra.mxu0 0
      %1150 = vmatprep.subr.bf16.mxu0 0
      %1151 = vmatpush2.bf16.msra.mxu0 0
      %1152 = vmatprep.subr.bf16.mxu0 0
      %1153 = vmatpush2.bf16.msra.mxu0 0
      %1154 = vmatprep.mubr.bf16.mxu0 0
      %1155 = vmatmul.mubr.bf16.gmra.mxu0 %v1070
      %v1156 = vpop.f32.mrf.mxu0
      %v1157 = vadd.f32 0.0, %v1156
      %v1158 = vpop.f32.mrf.mxu0
      %v1159 = vpop.f32.mrf.mxu0
      %v1160 = vpop.f32.mrf.mxu0
      %1161 = vdwg.mxu0
      %v1162 = vadd.f32 %v1055, %v1116
      %v1163 = vadd.f32 %v1056, %v1118
      %v1164 = vadd.f32 %v1057, %v1157
      %s1165 = scalar_lea.vmem %s1, 32
      %v1166 = vld [vmem:[%s1165] sm:$0xf]
      %1167 = vrot.lane.b32.xlu0 %v317, 90
      %v1168 = vpop.permute.xlu0 %1167
      %1169 = vrot.lane.b32.xlu0 %v325, 90
      %v1170 = vpop.permute.xlu0 %1169
      %1171 = vrot.lane.b32.xlu0 %v324, 90
      %v1172 = vpop.permute.xlu0 %1171
      %vm1173 = vcmask 736256
      %v1174 = vsel %vm1173, %v1168, %v1170
      %v1175 = vsel %vm1173, %v1170, %v1172
      %v1177 = vsel %vm335, %v1166, 0
      %v1180 = vsel %vm339, %v1174, 0
      %v1183 = vsel %vm339, %v1175, 0
      %v1186 = vsel %vm339, %v1172, 0
      %1188 = vmatprep.subr.bf16.mxu0 0
      %1189 = vmatpush1.bf16.msra.mxu0 0
      %1190 = vmatprep.subr.bf16.mxu0 0
      %1191 = vmatpush1.bf16.msra.mxu0 0
      %1192 = vmatprep.subr.bf16.mxu0 0
      %1193 = vmatpush1.bf16.msra.mxu0 0
      %1194 = vmatprep.subr.bf16.mxu0 0
      %1195 = vmatpush1.bf16.msra.mxu0 0
      %1196 = vmatprep.subr.bf16.mxu0 0
      %1197 = vmatpush1.bf16.msra.mxu0 0
      %1198 = vmatprep.subr.bf16.mxu0 0
      %1199 = vmatpush1.bf16.msra.mxu0 0
      %1200 = vmatprep.subr.bf16.mxu0 0
      %1201 = vmatpush1.bf16.msra.mxu0 0
      %1202 = vmatprep.subr.bf16.mxu0 %v1183
      %1203 = vmatpush1.bf16.msra.mxu0 %v1180
      %1204 = vmatprep.subr.bf16.mxu0 0
      %1205 = vmatpush2.bf16.msra.mxu0 0
      %1206 = vmatprep.subr.bf16.mxu0 0
      %1207 = vmatpush2.bf16.msra.mxu0 0
      %1208 = vmatprep.subr.bf16.mxu0 0
      %1209 = vmatpush2.bf16.msra.mxu0 0
      %1210 = vmatprep.subr.bf16.mxu0 0
      %1211 = vmatpush2.bf16.msra.mxu0 0
      %1212 = vmatprep.subr.bf16.mxu0 0
      %1213 = vmatpush2.bf16.msra.mxu0 0
      %1214 = vmatprep.subr.bf16.mxu0 0
      %1215 = vmatpush2.bf16.msra.mxu0 0
      %1216 = vmatprep.subr.bf16.mxu0 0
      %1217 = vmatpush2.bf16.msra.mxu0 0
      %1218 = vmatprep.subr.bf16.mxu0 0
      %1219 = vmatpush2.bf16.msra.mxu0 0
      %1220 = vmatprep.mubr.bf16.mxu0 0
      %1221 = vmatmul.mubr.bf16.gmra.mxu0 %v1177
      %v1222 = vpop.f32.mrf.mxu0
      %v1223 = vadd.f32 0.0, %v1222
      %v1224 = vpop.f32.mrf.mxu0
      %v1225 = vadd.f32 0.0, %v1224
      %v1226 = vpop.f32.mrf.mxu0
      %v1227 = vpop.f32.mrf.mxu0
      %1228 = vdwg.mxu0
      %1229 = vmatprep.subr.bf16.mxu0 0
      %1230 = vmatpush1.bf16.msra.mxu0 0
      %1231 = vmatprep.subr.bf16.mxu0 0
      %1232 = vmatpush1.bf16.msra.mxu0 0
      %1233 = vmatprep.subr.bf16.mxu0 0
      %1234 = vmatpush1.bf16.msra.mxu0 0
      %1235 = vmatprep.subr.bf16.mxu0 0
      %1236 = vmatpush1.bf16.msra.mxu0 0
      %1237 = vmatprep.subr.bf16.mxu0 0
      %1238 = vmatpush1.bf16.msra.mxu0 0
      %1239 = vmatprep.subr.bf16.mxu0 0
      %1240 = vmatpush1.bf16.msra.mxu0 0
      %1241 = vmatprep.subr.bf16.mxu0 0
      %1242 = vmatpush1.bf16.msra.mxu0 0
      %1243 = vmatprep.subr.bf16.mxu0 0
      %1244 = vmatpush1.bf16.msra.mxu0 %v1186
      %1245 = vmatprep.subr.bf16.mxu0 0
      %1246 = vmatpush2.bf16.msra.mxu0 0
      %1247 = vmatprep.subr.bf16.mxu0 0
      %1248 = vmatpush2.bf16.msra.mxu0 0
      %1249 = vmatprep.subr.bf16.mxu0 0
      %1250 = vmatpush2.bf16.msra.mxu0 0
      %1251 = vmatprep.subr.bf16.mxu0 0
      %1252 = vmatpush2.bf16.msra.mxu0 0
      %1253 = vmatprep.subr.bf16.mxu0 0
      %1254 = vmatpush2.bf16.msra.mxu0 0
      %1255 = vmatprep.subr.bf16.mxu0 0
      %1256 = vmatpush2.bf16.msra.mxu0 0
      %1257 = vmatprep.subr.bf16.mxu0 0
      %1258 = vmatpush2.bf16.msra.mxu0 0
      %1259 = vmatprep.subr.bf16.mxu0 0
      %1260 = vmatpush2.bf16.msra.mxu0 0
      %1261 = vmatprep.mubr.bf16.mxu0 0
      %1262 = vmatmul.mubr.bf16.gmra.mxu0 %v1177
      %v1263 = vpop.f32.mrf.mxu0
      %v1264 = vadd.f32 0.0, %v1263
      %v1265 = vpop.f32.mrf.mxu0
      %v1266 = vpop.f32.mrf.mxu0
      %v1267 = vpop.f32.mrf.mxu0
      %1268 = vdwg.mxu0
      %v1269 = vadd.f32 %v1162, %v1223
      %v1270 = vadd.f32 %v1163, %v1225
      %v1271 = vadd.f32 %v1164, %v1264
      %v1272 = vld [vmem:[%s2] sm:$0xff]
      %1274 = vset.pattern.permute.xlu0 0
      %1275 = vperm.xlu0 %1274, %v1272
      %v1276 = vpop.permute.xlu0 %1275
      %v1278 = vadd.f32 %v1269, %v1276
      %v1279 = vadd.f32 %v1270, %v1276
      %v1280 = vadd.f32 %v1271, %v1276
      %v1281 = vmax.f32 %v1278, 0.0
      %v1282 = vmax.f32 %v1279, 0.0
      %v1283 = vmax.f32 %v1280, 0.0
      %v1284 = vpack.c.bf16 %v1281, %v1281
      %v1285 = vpack.c.bf16 %v1282, %v1282
      %v1286 = vpack.c.bf16 %v1283, %v1283
      %v1287 = vld [vmem:[%s5] sm:$0xf]
      %v1288 = vld [vmem:[%s5 + $0x4] sm:$0xf]
      %v1289 = vld [vmem:[%s5 + $0x8] sm:$0xf]
      %v1290 = vld [vmem:[%s5 + $0xc] sm:$0xf]
      %v1291 = vld [vmem:[%s5 + $0x10] sm:$0xf]
      %v1292 = vld [vmem:[%s5 + $0x14] sm:$0xf]
      %v1293 = vld [vmem:[%s5 + $0x18] sm:$0xf]
      %v1294 = vld [vmem:[%s5 + $0x1c] sm:$0xf]
      %v1295 = vld [vmem:[%s5 + $0x20] sm:$0xf]
      %v1296 = vld [vmem:[%s5 + $0x24] sm:$0xf]
      %v1297 = vld [vmem:[%s5 + $0x28] sm:$0xf]
      %v1298 = vld [vmem:[%s5 + $0x2c] sm:$0xf]
      %v1299 = vld [vmem:[%s5 + $0x30] sm:$0xf]
      %v1300 = vld [vmem:[%s5 + $0x34] sm:$0xf]
      %v1301 = vld [vmem:[%s5 + $0x38] sm:$0xf]
      %v1302 = vld [vmem:[%s5 + $0x3c] sm:$0xf]
      %v1303 = vld [vmem:[%s5 + $0x40] sm:$0xf]
      %v1304 = vld [vmem:[%s5 + $0x44] sm:$0xf]
      %v1305 = vld [vmem:[%s5 + $0x48] sm:$0xf]
      %v1306 = vld [vmem:[%s5 + $0x4c] sm:$0xf]
      %v1307 = vld [vmem:[%s5 + $0x50] sm:$0xf]
      %v1308 = vld [vmem:[%s5 + $0x54] sm:$0xf]
      %v1309 = vld [vmem:[%s5 + $0x58] sm:$0xf]
      %v1310 = vld [vmem:[%s5 + $0x5c] sm:$0xf]
      %v1311 = vld [vmem:[%s5 + $0x60] sm:$0xf]
      %v1312 = vld [vmem:[%s5 + $0x64] sm:$0xf]
      %v1313 = vld [vmem:[%s5 + $0x68] sm:$0xf]
      %v1314 = vld [vmem:[%s5 + $0x6c] sm:$0xf]
      %v1315 = vld [vmem:[%s5 + $0x70] sm:$0xf]
      %v1316 = vld [vmem:[%s5 + $0x74] sm:$0xf]
      %v1317 = vld [vmem:[%s5 + $0x78] sm:$0xf]
      %v1318 = vld [vmem:[%s5 + $0x7c] sm:$0xf]
      %v1319 = vld [vmem:[%s5 + $0x80] sm:$0xf]
      %v1320 = vld [vmem:[%s5 + $0x84] sm:$0xf]
      %v1321 = vld [vmem:[%s5 + $0x88] sm:$0xf]
      %v1322 = vld [vmem:[%s5 + $0x8c] sm:$0xf]
      %v1323 = vld [vmem:[%s5 + $0x90] sm:$0xf]
      %v1324 = vld [vmem:[%s5 + $0x94] sm:$0xf]
      %v1325 = vld [vmem:[%s5 + $0x98] sm:$0xf]
      %v1326 = vld [vmem:[%s5 + $0x9c] sm:$0xf]
      %v1327 = vld [vmem:[%s5 + $0xa0] sm:$0x3]
      %v1369 = vunpack.c.l.b16 %v1287
      %v1370 = vunpack.c.l.b16 %v1288
      %v1371 = vunpack.c.l.b16 %v1289
      %v1372 = vunpack.c.l.b16 %v1290
      %v1373 = vunpack.c.l.b16 %v1291
      %v1374 = vunpack.c.l.b16 %v1292
      %v1375 = vunpack.c.l.b16 %v1293
      %v1376 = vunpack.c.l.b16 %v1294
      %v1377 = vunpack.c.l.b16 %v1295
      %v1378 = vunpack.c.l.b16 %v1296
      %v1379 = vunpack.c.l.b16 %v1297
      %v1380 = vunpack.c.l.b16 %v1298
      %v1381 = vunpack.c.l.b16 %v1299
      %v1382 = vunpack.c.l.b16 %v1300
      %v1383 = vunpack.c.l.b16 %v1301
      %v1384 = vunpack.c.l.b16 %v1302
      %v1385 = vunpack.c.l.b16 %v1303
      %v1386 = vunpack.c.l.b16 %v1304
      %v1387 = vunpack.c.l.b16 %v1305
      %v1388 = vunpack.c.l.b16 %v1306
      %v1389 = vunpack.c.l.b16 %v1307
      %v1390 = vunpack.c.l.b16 %v1308
      %v1391 = vunpack.c.l.b16 %v1309
      %v1392 = vunpack.c.l.b16 %v1310
      %v1393 = vunpack.c.l.b16 %v1311
      %v1394 = vunpack.c.l.b16 %v1312
      %v1395 = vunpack.c.l.b16 %v1313
      %v1396 = vunpack.c.l.b16 %v1314
      %v1397 = vunpack.c.l.b16 %v1315
      %v1398 = vunpack.c.l.b16 %v1316
      %v1399 = vunpack.c.l.b16 %v1317
      %v1400 = vunpack.c.l.b16 %v1318
      %v1401 = vunpack.c.l.b16 %v1319
      %v1402 = vunpack.c.l.b16 %v1320
      %v1403 = vunpack.c.l.b16 %v1321
      %v1404 = vunpack.c.l.b16 %v1322
      %v1405 = vunpack.c.l.b16 %v1323
      %v1406 = vunpack.c.l.b16 %v1324
      %v1407 = vunpack.c.l.b16 %v1325
      %v1408 = vunpack.c.l.b16 %v1326
      %v1409 = vunpack.c.l.b16 %v1327
      %v1410 = vpack.c.b16 %v1370, %v1369
      %v1411 = vpack.c.b16 %v1372, %v1371
      %v1412 = vpack.c.b16 %v1374, %v1373
      %v1413 = vpack.c.b16 %v1376, %v1375
      %v1414 = vpack.c.b16 %v1378, %v1377
      %v1415 = vpack.c.b16 %v1380, %v1379
      %v1416 = vpack.c.b16 %v1382, %v1381
      %v1417 = vpack.c.b16 %v1384, %v1383
      %v1418 = vpack.c.b16 %v1386, %v1385
      %v1419 = vpack.c.b16 %v1388, %v1387
      %v1420 = vpack.c.b16 %v1390, %v1389
      %v1421 = vpack.c.b16 %v1392, %v1391
      %v1422 = vpack.c.b16 %v1394, %v1393
      %v1423 = vpack.c.b16 %v1396, %v1395
      %v1424 = vpack.c.b16 %v1398, %v1397
      %v1425 = vpack.c.b16 %v1400, %v1399
      %v1426 = vpack.c.b16 %v1402, %v1401
      %v1427 = vpack.c.b16 %v1404, %v1403
      %v1428 = vpack.c.b16 %v1406, %v1405
      %v1429 = vpack.c.b16 %v1408, %v1407
      %v1430 = vpack.c.b16 %v1409, %v1409
      %vm1451 = vcmask 556032
      %v1453 = vsel %vm1451, %v1286, 0
      %v1456 = vsel %vm339, %v1430, 0
      %1458 = vmatprep.subr.bf16.mxu0 0
      %1459 = vmatpush1.bf16.msra.mxu0 %v1417
      %1460 = vmatprep.subr.bf16.mxu0 0
      %1461 = vmatpush1.bf16.msra.mxu0 %v1416
      %1462 = vmatprep.subr.bf16.mxu0 0
      %1463 = vmatpush1.bf16.msra.mxu0 %v1415
      %1464 = vmatprep.subr.bf16.mxu0 0
      %1465 = vmatpush1.bf16.msra.mxu0 %v1414
      %1466 = vmatprep.subr.bf16.mxu0 0
      %1467 = vmatpush1.bf16.msra.mxu0 %v1413
      %1468 = vmatprep.subr.bf16.mxu0 0
      %1469 = vmatpush1.bf16.msra.mxu0 %v1412
      %1470 = vmatprep.subr.bf16.mxu0 0
      %1471 = vmatpush1.bf16.msra.mxu0 %v1411
      %1472 = vmatprep.subr.bf16.mxu0 0
      %1473 = vmatpush1.bf16.msra.mxu0 %v1410
      %1474 = vmatprep.subr.bf16.mxu0 0
      %1475 = vmatpush2.bf16.msra.mxu0 %v1425
      %1476 = vmatprep.subr.bf16.mxu0 0
      %1477 = vmatpush2.bf16.msra.mxu0 %v1424
      %1478 = vmatprep.subr.bf16.mxu0 0
      %1479 = vmatpush2.bf16.msra.mxu0 %v1423
      %1480 = vmatprep.subr.bf16.mxu0 0
      %1481 = vmatpush2.bf16.msra.mxu0 %v1422
      %1482 = vmatprep.subr.bf16.mxu0 0
      %1483 = vmatpush2.bf16.msra.mxu0 %v1421
      %1484 = vmatprep.subr.bf16.mxu0 0
      %1485 = vmatpush2.bf16.msra.mxu0 %v1420
      %1486 = vmatprep.subr.bf16.mxu0 0
      %1487 = vmatpush2.bf16.msra.mxu0 %v1419
      %1488 = vmatprep.subr.bf16.mxu0 0
      %1489 = vmatpush2.bf16.msra.mxu0 %v1418
      %1490 = vmatprep.mubr.bf16.mxu0 %v1285
      %1491 = vmatmul.mubr.bf16.gmra.mxu0 %v1284
      %v1492 = vpop.f32.mrf.mxu0
      %v1493 = vadd.f32 0.0, %v1492
      %v1494 = vpop.f32.mrf.mxu0
      %v1495 = vpop.f32.mrf.mxu0
      %v1496 = vpop.f32.mrf.mxu0
      %1497 = vdwg.mxu0
      %1498 = vmatprep.subr.bf16.mxu0 0
      %1499 = vmatpush1.bf16.msra.mxu0 0
      %1500 = vmatprep.subr.bf16.mxu0 0
      %1501 = vmatpush1.bf16.msra.mxu0 0
      %1502 = vmatprep.subr.bf16.mxu0 0
      %1503 = vmatpush1.bf16.msra.mxu0 0
      %1504 = vmatprep.subr.bf16.mxu0 0
      %1505 = vmatpush1.bf16.msra.mxu0 %v1456
      %1506 = vmatprep.subr.bf16.mxu0 0
      %1507 = vmatpush1.bf16.msra.mxu0 %v1429
      %1508 = vmatprep.subr.bf16.mxu0 0
      %1509 = vmatpush1.bf16.msra.mxu0 %v1428
      %1510 = vmatprep.subr.bf16.mxu0 0
      %1511 = vmatpush1.bf16.msra.mxu0 %v1427
      %1512 = vmatprep.subr.bf16.mxu0 0
      %1513 = vmatpush1.bf16.msra.mxu0 %v1426
      %1514 = vmatprep.subr.bf16.mxu0 0
      %1515 = vmatpush2.bf16.msra.mxu0 0
      %1516 = vmatprep.subr.bf16.mxu0 0
      %1517 = vmatpush2.bf16.msra.mxu0 0
      %1518 = vmatprep.subr.bf16.mxu0 0
      %1519 = vmatpush2.bf16.msra.mxu0 0
      %1520 = vmatprep.subr.bf16.mxu0 0
      %1521 = vmatpush2.bf16.msra.mxu0 0
      %1522 = vmatprep.subr.bf16.mxu0 0
      %1523 = vmatpush2.bf16.msra.mxu0 0
      %1524 = vmatprep.subr.bf16.mxu0 0
      %1525 = vmatpush2.bf16.msra.mxu0 0
      %1526 = vmatprep.subr.bf16.mxu0 0
      %1527 = vmatpush2.bf16.msra.mxu0 0
      %1528 = vmatprep.subr.bf16.mxu0 0
      %1529 = vmatpush2.bf16.msra.mxu0 0
      %1530 = vmatprep.mubr.bf16.mxu0 0
      %1531 = vmatmul.mubr.bf16.gmra.mxu0 %v1453
      %v1532 = vpop.f32.mrf.mxu0
      %v1533 = vadd.f32 %v1493, %v1532
      %v1534 = vpop.f32.mrf.mxu0
      %v1535 = vpop.f32.mrf.mxu0
      %v1536 = vpop.f32.mrf.mxu0
      %1537 = vdwg.mxu0
      %vm1538 = vcmask 994304
      %1539 = vst.msk [vmem:[#allocation2] sm:$0xf] %vm1538, 0
      %v1540 = vpack.c.bf16 %v1533, %v1533
      %v1542 = vunpack.c.l.b16 %v1540
      %v1543 = vpack.c.b16 %v1542, %v1542
      %1544 = vrot.lane.b32.xlu0 %v1543, 11
      %v1545 = vpop.permute.xlu0 %1544
      %vm1547 = vcmask 904280
      %1548 = vst.msk [vmem:[#allocation2] sm:$0xf] %vm1547, %v1545
      %v1549 = vld [vmem:[%s3] sm:$0xf]
      %v1550 = vld [vmem:[#allocation2] sm:$0xf]
      %s1551 = scalar_lea.vmem %s3, 4
      %v1552 = vld [vmem:[%s1551] sm:$0xf]
      %v1554 = vunpack.c.l.b16 %v1550
      %v1555 = vpack.c.b16 %v1554, %v1554
      %1556 = vrot.lane.b32.xlu0 %v1555, 127
      %v1557 = vpop.permute.xlu0 %1556
      %vm1558 = vcmask 64512
      %v1560 = vsel %vm1558, %v1552, 0
      %vm1562 = vcmask 1043456
      %v1564 = vsel %vm1562, %v1557, 0
      %1566 = vmatprep.subr.bf16.mxu0 0
      %1567 = vmatpush1.bf16.msra.mxu0 0
      %1568 = vmatprep.subr.bf16.mxu0 0
      %1569 = vmatpush1.bf16.msra.mxu0 0
      %1570 = vmatprep.subr.bf16.mxu0 0
      %1571 = vmatpush1.bf16.msra.mxu0 0
      %1572 = vmatprep.subr.bf16.mxu0 0
      %1573 = vmatpush1.bf16.msra.mxu0 0
      %1574 = vmatprep.subr.bf16.mxu0 0
      %1575 = vmatpush1.bf16.msra.mxu0 0
      %1576 = vmatprep.subr.bf16.mxu0 0
      %1577 = vmatpush1.bf16.msra.mxu0 0
      %1578 = vmatprep.subr.bf16.mxu0 0
      %1579 = vmatpush1.bf16.msra.mxu0 0
      %1580 = vmatprep.subr.bf16.mxu0 0
      %1581 = vmatpush1.bf16.msra.mxu0 %v1564
      %1582 = vmatprep.subr.bf16.mxu0 0
      %1583 = vmatpush2.bf16.msra.mxu0 0
      %1584 = vmatprep.subr.bf16.mxu0 0
      %1585 = vmatpush2.bf16.msra.mxu0 0
      %1586 = vmatprep.subr.bf16.mxu0 0
      %1587 = vmatpush2.bf16.msra.mxu0 0
      %1588 = vmatprep.subr.bf16.mxu0 0
      %1589 = vmatpush2.bf16.msra.mxu0 0
      %1590 = vmatprep.subr.bf16.mxu0 0
      %1591 = vmatpush2.bf16.msra.mxu0 0
      %1592 = vmatprep.subr.bf16.mxu0 0
      %1593 = vmatpush2.bf16.msra.mxu0 0
      %1594 = vmatprep.subr.bf16.mxu0 0
      %1595 = vmatpush2.bf16.msra.mxu0 0
      %1596 = vmatprep.subr.bf16.mxu0 0
      %1597 = vmatpush2.bf16.msra.mxu0 0
      %1598 = vmatprep.mubr.bf16.mxu0 0
      %1599 = vmatmul.mubr.bf16.gmra.mxu0 %v1560
      %v1600 = vpop.f32.mrf.mxu0
      %v1601 = vadd.f32 0.0, %v1600
      %v1602 = vpop.f32.mrf.mxu0
      %v1603 = vpop.f32.mrf.mxu0
      %v1604 = vpop.f32.mrf.mxu0
      %1605 = vdwg.mxu0
      %v1607 = vsel %vm1558, %v1549, 0
      %v1610 = vsel %vm1562, %v1550, 0
      %1612 = vmatprep.subr.bf16.mxu0 0
      %1613 = vmatpush1.bf16.msra.mxu0 0
      %1614 = vmatprep.subr.bf16.mxu0 0
      %1615 = vmatpush1.bf16.msra.mxu0 0
      %1616 = vmatprep.subr.bf16.mxu0 0
      %1617 = vmatpush1.bf16.msra.mxu0 0
      %1618 = vmatprep.subr.bf16.mxu0 0
      %1619 = vmatpush1.bf16.msra.mxu0 0
      %1620 = vmatprep.subr.bf16.mxu0 0
      %1621 = vmatpush1.bf16.msra.mxu0 0
      %1622 = vmatprep.subr.bf16.mxu0 0
      %1623 = vmatpush1.bf16.msra.mxu0 0
      %1624 = vmatprep.subr.bf16.mxu0 0
      %1625 = vmatpush1.bf16.msra.mxu0 0
      %1626 = vmatprep.subr.bf16.mxu0 0
      %1627 = vmatpush1.bf16.msra.mxu0 %v1610
      %1628 = vmatprep.subr.bf16.mxu0 0
      %1629 = vmatpush2.bf16.msra.mxu0 0
      %1630 = vmatprep.subr.bf16.mxu0 0
      %1631 = vmatpush2.bf16.msra.mxu0 0
      %1632 = vmatprep.subr.bf16.mxu0 0
      %1633 = vmatpush2.bf16.msra.mxu0 0
      %1634 = vmatprep.subr.bf16.mxu0 0
      %1635 = vmatpush2.bf16.msra.mxu0 0
      %1636 = vmatprep.subr.bf16.mxu0 0
      %1637 = vmatpush2.bf16.msra.mxu0 0
      %1638 = vmatprep.subr.bf16.mxu0 0
      %1639 = vmatpush2.bf16.msra.mxu0 0
      %1640 = vmatprep.subr.bf16.mxu0 0
      %1641 = vmatpush2.bf16.msra.mxu0 0
      %1642 = vmatprep.subr.bf16.mxu0 0
      %1643 = vmatpush2.bf16.msra.mxu0 0
      %1644 = vmatprep.mubr.bf16.mxu0 0
      %1645 = vmatmul.mubr.bf16.gmra.mxu0 %v1607
      %v1646 = vpop.f32.mrf.mxu0
      %v1647 = vadd.f32 %v1601, %v1646
      %v1648 = vpop.f32.mrf.mxu0
      %v1649 = vpop.f32.mrf.mxu0
      %v1650 = vpop.f32.mrf.mxu0
      %1651 = vdwg.mxu0
      %s1652 = scalar_lea.vmem %s3, 8
      %v1653 = vld [vmem:[%s1652] sm:$0xf]
      %1654 = vrot.lane.b32.xlu0 %v1555, 126
      %v1655 = vpop.permute.xlu0 %1654
      %v1657 = vsel %vm1558, %v1653, 0
      %v1660 = vsel %vm1562, %v1655, 0
      %1662 = vmatprep.subr.bf16.mxu0 0
      %1663 = vmatpush1.bf16.msra.mxu0 0
      %1664 = vmatprep.subr.bf16.mxu0 0
      %1665 = vmatpush1.bf16.msra.mxu0 0
      %1666 = vmatprep.subr.bf16.mxu0 0
      %1667 = vmatpush1.bf16.msra.mxu0 0
      %1668 = vmatprep.subr.bf16.mxu0 0
      %1669 = vmatpush1.bf16.msra.mxu0 0
      %1670 = vmatprep.subr.bf16.mxu0 0
      %1671 = vmatpush1.bf16.msra.mxu0 0
      %1672 = vmatprep.subr.bf16.mxu0 0
      %1673 = vmatpush1.bf16.msra.mxu0 0
      %1674 = vmatprep.subr.bf16.mxu0 0
      %1675 = vmatpush1.bf16.msra.mxu0 0
      %1676 = vmatprep.subr.bf16.mxu0 0
      %1677 = vmatpush1.bf16.msra.mxu0 %v1660
      %1678 = vmatprep.subr.bf16.mxu0 0
      %1679 = vmatpush2.bf16.msra.mxu0 0
      %1680 = vmatprep.subr.bf16.mxu0 0
      %1681 = vmatpush2.bf16.msra.mxu0 0
      %1682 = vmatprep.subr.bf16.mxu0 0
      %1683 = vmatpush2.bf16.msra.mxu0 0
      %1684 = vmatprep.subr.bf16.mxu0 0
      %1685 = vmatpush2.bf16.msra.mxu0 0
      %1686 = vmatprep.subr.bf16.mxu0 0
      %1687 = vmatpush2.bf16.msra.mxu0 0
      %1688 = vmatprep.subr.bf16.mxu0 0
      %1689 = vmatpush2.bf16.msra.mxu0 0
      %1690 = vmatprep.subr.bf16.mxu0 0
      %1691 = vmatpush2.bf16.msra.mxu0 0
      %1692 = vmatprep.subr.bf16.mxu0 0
      %1693 = vmatpush2.bf16.msra.mxu0 0
      %1694 = vmatprep.mubr.bf16.mxu0 0
      %1695 = vmatmul.mubr.bf16.gmra.mxu0 %v1657
      %v1696 = vpop.f32.mrf.mxu0
      %v1697 = vadd.f32 0.0, %v1696
      %v1698 = vpop.f32.mrf.mxu0
      %v1699 = vpop.f32.mrf.mxu0
      %v1700 = vpop.f32.mrf.mxu0
      %1701 = vdwg.mxu0
      %v1702 = vadd.f32 %v1647, %v1697
      %s1703 = scalar_lea.vmem %s3, 12
      %v1704 = vld [vmem:[%s1703] sm:$0xf]
      %1705 = vrot.lane.b32.xlu0 %v1555, 118
      %v1706 = vpop.permute.xlu0 %1705
      %v1708 = vsel %vm1558, %v1704, 0
      %v1711 = vsel %vm1562, %v1706, 0
      %1713 = vmatprep.subr.bf16.mxu0 0
      %1714 = vmatpush1.bf16.msra.mxu0 0
      %1715 = vmatprep.subr.bf16.mxu0 0
      %1716 = vmatpush1.bf16.msra.mxu0 0
      %1717 = vmatprep.subr.bf16.mxu0 0
      %1718 = vmatpush1.bf16.msra.mxu0 0
      %1719 = vmatprep.subr.bf16.mxu0 0
      %1720 = vmatpush1.bf16.msra.mxu0 0
      %1721 = vmatprep.subr.bf16.mxu0 0
      %1722 = vmatpush1.bf16.msra.mxu0 0
      %1723 = vmatprep.subr.bf16.mxu0 0
      %1724 = vmatpush1.bf16.msra.mxu0 0
      %1725 = vmatprep.subr.bf16.mxu0 0
      %1726 = vmatpush1.bf16.msra.mxu0 0
      %1727 = vmatprep.subr.bf16.mxu0 0
      %1728 = vmatpush1.bf16.msra.mxu0 %v1711
      %1729 = vmatprep.subr.bf16.mxu0 0
      %1730 = vmatpush2.bf16.msra.mxu0 0
      %1731 = vmatprep.subr.bf16.mxu0 0
      %1732 = vmatpush2.bf16.msra.mxu0 0
      %1733 = vmatprep.subr.bf16.mxu0 0
      %1734 = vmatpush2.bf16.msra.mxu0 0
      %1735 = vmatprep.subr.bf16.mxu0 0
      %1736 = vmatpush2.bf16.msra.mxu0 0
      %1737 = vmatprep.subr.bf16.mxu0 0
      %1738 = vmatpush2.bf16.msra.mxu0 0
      %1739 = vmatprep.subr.bf16.mxu0 0
      %1740 = vmatpush2.bf16.msra.mxu0 0
      %1741 = vmatprep.subr.bf16.mxu0 0
      %1742 = vmatpush2.bf16.msra.mxu0 0
      %1743 = vmatprep.subr.bf16.mxu0 0
      %1744 = vmatpush2.bf16.msra.mxu0 0
      %1745 = vmatprep.mubr.bf16.mxu0 0
      %1746 = vmatmul.mubr.bf16.gmra.mxu0 %v1708
      %v1747 = vpop.f32.mrf.mxu0
      %v1748 = vadd.f32 0.0, %v1747
      %v1749 = vpop.f32.mrf.mxu0
      %v1750 = vpop.f32.mrf.mxu0
      %v1751 = vpop.f32.mrf.mxu0
      %1752 = vdwg.mxu0
      %v1753 = vadd.f32 %v1702, %v1748
      %s1754 = scalar_lea.vmem %s3, 16
      %v1755 = vld [vmem:[%s1754] sm:$0xf]
      %1756 = vrot.lane.b32.xlu0 %v1555, 117
      %v1757 = vpop.permute.xlu0 %1756
      %v1759 = vsel %vm1558, %v1755, 0
      %v1762 = vsel %vm1562, %v1757, 0
      %1764 = vmatprep.subr.bf16.mxu0 0
      %1765 = vmatpush1.bf16.msra.mxu0 0
      %1766 = vmatprep.subr.bf16.mxu0 0
      %1767 = vmatpush1.bf16.msra.mxu0 0
      %1768 = vmatprep.subr.bf16.mxu0 0
      %1769 = vmatpush1.bf16.msra.mxu0 0
      %1770 = vmatprep.subr.bf16.mxu0 0
      %1771 = vmatpush1.bf16.msra.mxu0 0
      %1772 = vmatprep.subr.bf16.mxu0 0
      %1773 = vmatpush1.bf16.msra.mxu0 0
      %1774 = vmatprep.subr.bf16.mxu0 0
      %1775 = vmatpush1.bf16.msra.mxu0 0
      %1776 = vmatprep.subr.bf16.mxu0 0
      %1777 = vmatpush1.bf16.msra.mxu0 0
      %1778 = vmatprep.subr.bf16.mxu0 0
      %1779 = vmatpush1.bf16.msra.mxu0 %v1762
      %1780 = vmatprep.subr.bf16.mxu0 0
      %1781 = vmatpush2.bf16.msra.mxu0 0
      %1782 = vmatprep.subr.bf16.mxu0 0
      %1783 = vmatpush2.bf16.msra.mxu0 0
      %1784 = vmatprep.subr.bf16.mxu0 0
      %1785 = vmatpush2.bf16.msra.mxu0 0
      %1786 = vmatprep.subr.bf16.mxu0 0
      %1787 = vmatpush2.bf16.msra.mxu0 0
      %1788 = vmatprep.subr.bf16.mxu0 0
      %1789 = vmatpush2.bf16.msra.mxu0 0
      %1790 = vmatprep.subr.bf16.mxu0 0
      %1791 = vmatpush2.bf16.msra.mxu0 0
      %1792 = vmatprep.subr.bf16.mxu0 0
      %1793 = vmatpush2.bf16.msra.mxu0 0
      %1794 = vmatprep.subr.bf16.mxu0 0
      %1795 = vmatpush2.bf16.msra.mxu0 0
      %1796 = vmatprep.mubr.bf16.mxu0 0
      %1797 = vmatmul.mubr.bf16.gmra.mxu0 %v1759
      %v1798 = vpop.f32.mrf.mxu0
      %v1799 = vadd.f32 0.0, %v1798
      %v1800 = vpop.f32.mrf.mxu0
      %v1801 = vpop.f32.mrf.mxu0
      %v1802 = vpop.f32.mrf.mxu0
      %1803 = vdwg.mxu0
      %v1804 = vadd.f32 %v1753, %v1799
      %s1805 = scalar_lea.vmem %s3, 20
      %v1806 = vld [vmem:[%s1805] sm:$0xf]
      %1807 = vrot.lane.b32.xlu0 %v1555, 116
      %v1808 = vpop.permute.xlu0 %1807
      %v1810 = vsel %vm1558, %v1806, 0
      %v1813 = vsel %vm1562, %v1808, 0
      %1815 = vmatprep.subr.bf16.mxu0 0
      %1816 = vmatpush1.bf16.msra.mxu0 0
      %1817 = vmatprep.subr.bf16.mxu0 0
      %1818 = vmatpush1.bf16.msra.mxu0 0
      %1819 = vmatprep.subr.bf16.mxu0 0
      %1820 = vmatpush1.bf16.msra.mxu0 0
      %1821 = vmatprep.subr.bf16.mxu0 0
      %1822 = vmatpush1.bf16.msra.mxu0 0
      %1823 = vmatprep.subr.bf16.mxu0 0
      %1824 = vmatpush1.bf16.msra.mxu0 0
      %1825 = vmatprep.subr.bf16.mxu0 0
      %1826 = vmatpush1.bf16.msra.mxu0 0
      %1827 = vmatprep.subr.bf16.mxu0 0
      %1828 = vmatpush1.bf16.msra.mxu0 0
      %1829 = vmatprep.subr.bf16.mxu0 0
      %1830 = vmatpush1.bf16.msra.mxu0 %v1813
      %1831 = vmatprep.subr.bf16.mxu0 0
      %1832 = vmatpush2.bf16.msra.mxu0 0
      %1833 = vmatprep.subr.bf16.mxu0 0
      %1834 = vmatpush2.bf16.msra.mxu0 0
      %1835 = vmatprep.subr.bf16.mxu0 0
      %1836 = vmatpush2.bf16.msra.mxu0 0
      %1837 = vmatprep.subr.bf16.mxu0 0
      %1838 = vmatpush2.bf16.msra.mxu0 0
      %1839 = vmatprep.subr.bf16.mxu0 0
      %1840 = vmatpush2.bf16.msra.mxu0 0
      %1841 = vmatprep.subr.bf16.mxu0 0
      %1842 = vmatpush2.bf16.msra.mxu0 0
      %1843 = vmatprep.subr.bf16.mxu0 0
      %1844 = vmatpush2.bf16.msra.mxu0 0
      %1845 = vmatprep.subr.bf16.mxu0 0
      %1846 = vmatpush2.bf16.msra.mxu0 0
      %1847 = vmatprep.mubr.bf16.mxu0 0
      %1848 = vmatmul.mubr.bf16.gmra.mxu0 %v1810
      %v1849 = vpop.f32.mrf.mxu0
      %v1850 = vadd.f32 0.0, %v1849
      %v1851 = vpop.f32.mrf.mxu0
      %v1852 = vpop.f32.mrf.mxu0
      %v1853 = vpop.f32.mrf.mxu0
      %1854 = vdwg.mxu0
      %v1855 = vadd.f32 %v1804, %v1850
      %s1856 = scalar_lea.vmem %s3, 24
      %v1857 = vld [vmem:[%s1856] sm:$0xf]
      %1858 = vrot.lane.b32.xlu0 %v1555, 108
      %v1859 = vpop.permute.xlu0 %1858
      %v1861 = vsel %vm1558, %v1857, 0
      %v1864 = vsel %vm1562, %v1859, 0
      %1866 = vmatprep.subr.bf16.mxu0 0
      %1867 = vmatpush1.bf16.msra.mxu0 0
      %1868 = vmatprep.subr.bf16.mxu0 0
      %1869 = vmatpush1.bf16.msra.mxu0 0
      %1870 = vmatprep.subr.bf16.mxu0 0
      %1871 = vmatpush1.bf16.msra.mxu0 0
      %1872 = vmatprep.subr.bf16.mxu0 0
      %1873 = vmatpush1.bf16.msra.mxu0 0
      %1874 = vmatprep.subr.bf16.mxu0 0
      %1875 = vmatpush1.bf16.msra.mxu0 0
      %1876 = vmatprep.subr.bf16.mxu0 0
      %1877 = vmatpush1.bf16.msra.mxu0 0
      %1878 = vmatprep.subr.bf16.mxu0 0
      %1879 = vmatpush1.bf16.msra.mxu0 0
      %1880 = vmatprep.subr.bf16.mxu0 0
      %1881 = vmatpush1.bf16.msra.mxu0 %v1864
      %1882 = vmatprep.subr.bf16.mxu0 0
      %1883 = vmatpush2.bf16.msra.mxu0 0
      %1884 = vmatprep.subr.bf16.mxu0 0
      %1885 = vmatpush2.bf16.msra.mxu0 0
      %1886 = vmatprep.subr.bf16.mxu0 0
      %1887 = vmatpush2.bf16.msra.mxu0 0
      %1888 = vmatprep.subr.bf16.mxu0 0
      %1889 = vmatpush2.bf16.msra.mxu0 0
      %1890 = vmatprep.subr.bf16.mxu0 0
      %1891 = vmatpush2.bf16.msra.mxu0 0
      %1892 = vmatprep.subr.bf16.mxu0 0
      %1893 = vmatpush2.bf16.msra.mxu0 0
      %1894 = vmatprep.subr.bf16.mxu0 0
      %1895 = vmatpush2.bf16.msra.mxu0 0
      %1896 = vmatprep.subr.bf16.mxu0 0
      %1897 = vmatpush2.bf16.msra.mxu0 0
      %1898 = vmatprep.mubr.bf16.mxu0 0
      %1899 = vmatmul.mubr.bf16.gmra.mxu0 %v1861
      %v1900 = vpop.f32.mrf.mxu0
      %v1901 = vadd.f32 0.0, %v1900
      %v1902 = vpop.f32.mrf.mxu0
      %v1903 = vpop.f32.mrf.mxu0
      %v1904 = vpop.f32.mrf.mxu0
      %1905 = vdwg.mxu0
      %v1906 = vadd.f32 %v1855, %v1901
      %s1907 = scalar_lea.vmem %s3, 28
      %v1908 = vld [vmem:[%s1907] sm:$0xf]
      %1909 = vrot.lane.b32.xlu0 %v1555, 107
      %v1910 = vpop.permute.xlu0 %1909
      %v1912 = vsel %vm1558, %v1908, 0
      %v1915 = vsel %vm1562, %v1910, 0
      %1917 = vmatprep.subr.bf16.mxu0 0
      %1918 = vmatpush1.bf16.msra.mxu0 0
      %1919 = vmatprep.subr.bf16.mxu0 0
      %1920 = vmatpush1.bf16.msra.mxu0 0
      %1921 = vmatprep.subr.bf16.mxu0 0
      %1922 = vmatpush1.bf16.msra.mxu0 0
      %1923 = vmatprep.subr.bf16.mxu0 0
      %1924 = vmatpush1.bf16.msra.mxu0 0
      %1925 = vmatprep.subr.bf16.mxu0 0
      %1926 = vmatpush1.bf16.msra.mxu0 0
      %1927 = vmatprep.subr.bf16.mxu0 0
      %1928 = vmatpush1.bf16.msra.mxu0 0
      %1929 = vmatprep.subr.bf16.mxu0 0
      %1930 = vmatpush1.bf16.msra.mxu0 0
      %1931 = vmatprep.subr.bf16.mxu0 0
      %1932 = vmatpush1.bf16.msra.mxu0 %v1915
      %1933 = vmatprep.subr.bf16.mxu0 0
      %1934 = vmatpush2.bf16.msra.mxu0 0
      %1935 = vmatprep.subr.bf16.mxu0 0
      %1936 = vmatpush2.bf16.msra.mxu0 0
      %1937 = vmatprep.subr.bf16.mxu0 0
      %1938 = vmatpush2.bf16.msra.mxu0 0
      %1939 = vmatprep.subr.bf16.mxu0 0
      %1940 = vmatpush2.bf16.msra.mxu0 0
      %1941 = vmatprep.subr.bf16.mxu0 0
      %1942 = vmatpush2.bf16.msra.mxu0 0
      %1943 = vmatprep.subr.bf16.mxu0 0
      %1944 = vmatpush2.bf16.msra.mxu0 0
      %1945 = vmatprep.subr.bf16.mxu0 0
      %1946 = vmatpush2.bf16.msra.mxu0 0
      %1947 = vmatprep.subr.bf16.mxu0 0
      %1948 = vmatpush2.bf16.msra.mxu0 0
      %1949 = vmatprep.mubr.bf16.mxu0 0
      %1950 = vmatmul.mubr.bf16.gmra.mxu0 %v1912
      %v1951 = vpop.f32.mrf.mxu0
      %v1952 = vadd.f32 0.0, %v1951
      %v1953 = vpop.f32.mrf.mxu0
      %v1954 = vpop.f32.mrf.mxu0
      %v1955 = vpop.f32.mrf.mxu0
      %1956 = vdwg.mxu0
      %v1957 = vadd.f32 %v1906, %v1952
      %s1958 = scalar_lea.vmem %s3, 32
      %v1959 = vld [vmem:[%s1958] sm:$0xf]
      %1960 = vrot.lane.b32.xlu0 %v1555, 106
      %v1961 = vpop.permute.xlu0 %1960
      %v1963 = vsel %vm1558, %v1959, 0
      %v1966 = vsel %vm1562, %v1961, 0
      %1968 = vmatprep.subr.bf16.mxu0 0
      %1969 = vmatpush1.bf16.msra.mxu0 0
      %1970 = vmatprep.subr.bf16.mxu0 0
      %1971 = vmatpush1.bf16.msra.mxu0 0
      %1972 = vmatprep.subr.bf16.mxu0 0
      %1973 = vmatpush1.bf16.msra.mxu0 0
      %1974 = vmatprep.subr.bf16.mxu0 0
      %1975 = vmatpush1.bf16.msra.mxu0 0
      %1976 = vmatprep.subr.bf16.mxu0 0
      %1977 = vmatpush1.bf16.msra.mxu0 0
      %1978 = vmatprep.subr.bf16.mxu0 0
      %1979 = vmatpush1.bf16.msra.mxu0 0
      %1980 = vmatprep.subr.bf16.mxu0 0
      %1981 = vmatpush1.bf16.msra.mxu0 0
      %1982 = vmatprep.subr.bf16.mxu0 0
      %1983 = vmatpush1.bf16.msra.mxu0 %v1966
      %1984 = vmatprep.subr.bf16.mxu0 0
      %1985 = vmatpush2.bf16.msra.mxu0 0
      %1986 = vmatprep.subr.bf16.mxu0 0
      %1987 = vmatpush2.bf16.msra.mxu0 0
      %1988 = vmatprep.subr.bf16.mxu0 0
      %1989 = vmatpush2.bf16.msra.mxu0 0
      %1990 = vmatprep.subr.bf16.mxu0 0
      %1991 = vmatpush2.bf16.msra.mxu0 0
      %1992 = vmatprep.subr.bf16.mxu0 0
      %1993 = vmatpush2.bf16.msra.mxu0 0
      %1994 = vmatprep.subr.bf16.mxu0 0
      %1995 = vmatpush2.bf16.msra.mxu0 0
      %1996 = vmatprep.subr.bf16.mxu0 0
      %1997 = vmatpush2.bf16.msra.mxu0 0
      %1998 = vmatprep.subr.bf16.mxu0 0
      %1999 = vmatpush2.bf16.msra.mxu0 0
      %2000 = vmatprep.mubr.bf16.mxu0 0
      %2001 = vmatmul.mubr.bf16.gmra.mxu0 %v1963
      %v2002 = vpop.f32.mrf.mxu0
      %v2003 = vadd.f32 0.0, %v2002
      %v2004 = vpop.f32.mrf.mxu0
      %v2005 = vpop.f32.mrf.mxu0
      %v2006 = vpop.f32.mrf.mxu0
      %2007 = vdwg.mxu0
      %v2008 = vadd.f32 %v1957, %v2003
      %v2009 = vld [vmem:[%s4] sm:$0xff]
      %2011 = vset.pattern.permute.xlu0 0
      %2012 = vperm.xlu0 %2011, %v2009
      %v2013 = vpop.permute.xlu0 %2012
      %v2015 = vadd.f32 %v2008, %v2013
      %v2016 = vld [vmem:[%s5] sm:$0xf]
      %v2017 = vld [vmem:[%s5 + $0x4] sm:$0xf]
      %v2018 = vld [vmem:[%s5 + $0x8] sm:$0xf]
      %v2019 = vld [vmem:[%s5 + $0xc] sm:$0xf]
      %v2020 = vld [vmem:[%s5 + $0x10] sm:$0xf]
      %v2021 = vld [vmem:[%s5 + $0x14] sm:$0xf]
      %v2022 = vld [vmem:[%s5 + $0x18] sm:$0xf]
      %v2023 = vld [vmem:[%s5 + $0x1c] sm:$0xf]
      %v2024 = vld [vmem:[%s5 + $0x20] sm:$0xf]
      %v2025 = vld [vmem:[%s5 + $0x24] sm:$0xf]
      %v2026 = vld [vmem:[%s5 + $0x28] sm:$0xf]
      %v2027 = vld [vmem:[%s5 + $0x2c] sm:$0xf]
      %v2028 = vld [vmem:[%s5 + $0x30] sm:$0xf]
      %v2029 = vld [vmem:[%s5 + $0x34] sm:$0xf]
      %v2030 = vld [vmem:[%s5 + $0x38] sm:$0xf]
      %v2031 = vld [vmem:[%s5 + $0x3c] sm:$0xf]
      %v2032 = vld [vmem:[%s5 + $0x40] sm:$0xf]
      %v2033 = vld [vmem:[%s5 + $0x44] sm:$0xf]
      %v2034 = vld [vmem:[%s5 + $0x48] sm:$0xf]
      %v2035 = vld [vmem:[%s5 + $0x4c] sm:$0xf]
      %v2036 = vld [vmem:[%s5 + $0x50] sm:$0xf]
      %v2037 = vld [vmem:[%s5 + $0x54] sm:$0xf]
      %v2038 = vld [vmem:[%s5 + $0x58] sm:$0xf]
      %v2039 = vld [vmem:[%s5 + $0x5c] sm:$0xf]
      %v2040 = vld [vmem:[%s5 + $0x60] sm:$0xf]
      %v2041 = vld [vmem:[%s5 + $0x64] sm:$0xf]
      %v2042 = vld [vmem:[%s5 + $0x68] sm:$0xf]
      %v2043 = vld [vmem:[%s5 + $0x6c] sm:$0xf]
      %v2044 = vld [vmem:[%s5 + $0x70] sm:$0xf]
      %v2045 = vld [vmem:[%s5 + $0x74] sm:$0xf]
      %v2046 = vld [vmem:[%s5 + $0x78] sm:$0xf]
      %v2047 = vld [vmem:[%s5 + $0x7c] sm:$0xf]
      %v2048 = vld [vmem:[%s5 + $0x80] sm:$0xf]
      %v2049 = vld [vmem:[%s5 + $0x84] sm:$0xf]
      %v2050 = vld [vmem:[%s5 + $0x88] sm:$0xf]
      %v2051 = vld [vmem:[%s5 + $0x8c] sm:$0xf]
      %v2052 = vld [vmem:[%s5 + $0x90] sm:$0xf]
      %v2053 = vld [vmem:[%s5 + $0x94] sm:$0xf]
      %v2054 = vld [vmem:[%s5 + $0x98] sm:$0xf]
      %v2055 = vld [vmem:[%s5 + $0x9c] sm:$0xf]
      %v2056 = vld [vmem:[%s5 + $0xa0] sm:$0x3]
      %v2100 = vunpack.c.l.b16 %v2016
      %v2101 = vunpack.c.l.b16 %v2017
      %v2102 = vunpack.c.l.b16 %v2018
      %v2103 = vunpack.c.l.b16 %v2019
      %v2104 = vunpack.c.l.b16 %v2020
      %v2105 = vunpack.c.l.b16 %v2021
      %v2106 = vunpack.c.l.b16 %v2022
      %v2107 = vunpack.c.l.b16 %v2023
      %v2108 = vunpack.c.l.b16 %v2024
      %v2109 = vunpack.c.l.b16 %v2025
      %v2110 = vunpack.c.l.b16 %v2026
      %v2111 = vunpack.c.l.b16 %v2027
      %v2112 = vunpack.c.l.b16 %v2028
      %v2113 = vunpack.c.l.b16 %v2029
      %v2114 = vunpack.c.l.b16 %v2030
      %v2115 = vunpack.c.l.b16 %v2031
      %v2116 = vunpack.c.l.b16 %v2032
      %v2117 = vunpack.c.l.b16 %v2033
      %v2118 = vunpack.c.l.b16 %v2034
      %v2119 = vunpack.c.l.b16 %v2035
      %v2120 = vunpack.c.l.b16 %v2036
      %v2121 = vunpack.c.l.b16 %v2037
      %v2122 = vunpack.c.l.b16 %v2038
      %v2123 = vunpack.c.l.b16 %v2039
      %v2124 = vunpack.c.l.b16 %v2040
      %v2125 = vunpack.c.l.b16 %v2041
      %v2126 = vunpack.c.l.b16 %v2042
      %v2127 = vunpack.c.l.b16 %v2043
      %v2128 = vunpack.c.l.b16 %v2044
      %v2129 = vunpack.c.l.b16 %v2045
      %v2130 = vunpack.c.l.b16 %v2046
      %v2131 = vunpack.c.l.b16 %v2047
      %v2132 = vunpack.c.l.b16 %v2048
      %v2133 = vunpack.c.l.b16 %v2049
      %v2134 = vunpack.c.l.b16 %v2050
      %v2135 = vunpack.c.l.b16 %v2051
      %v2136 = vunpack.c.l.b16 %v2052
      %v2137 = vunpack.c.l.b16 %v2053
      %v2138 = vunpack.c.l.b16 %v2054
      %v2139 = vunpack.c.l.b16 %v2055
      %v2140 = vunpack.c.l.b16 %v2056
      %v2141 = vpack.c.b16 %v2101, %v2100
      %v2142 = vpack.c.b16 %v2103, %v2102
      %v2143 = vpack.c.b16 %v2105, %v2104
      %v2144 = vpack.c.b16 %v2107, %v2106
      %v2145 = vpack.c.b16 %v2109, %v2108
      %v2146 = vpack.c.b16 %v2111, %v2110
      %v2147 = vpack.c.b16 %v2113, %v2112
      %v2148 = vpack.c.b16 %v2115, %v2114
      %v2149 = vpack.c.b16 %v2117, %v2116
      %v2150 = vpack.c.b16 %v2119, %v2118
      %v2151 = vpack.c.b16 %v2121, %v2120
      %v2152 = vpack.c.b16 %v2123, %v2122
      %v2153 = vpack.c.b16 %v2125, %v2124
      %v2154 = vpack.c.b16 %v2127, %v2126
      %v2155 = vpack.c.b16 %v2129, %v2128
      %v2156 = vpack.c.b16 %v2131, %v2130
      %v2157 = vpack.c.b16 %v2133, %v2132
      %v2158 = vpack.c.b16 %v2135, %v2134
      %v2159 = vpack.c.b16 %v2137, %v2136
      %v2160 = vpack.c.b16 %v2139, %v2138
      %v2161 = vpack.c.b16 %v2140, %v2140
      %v2182 = vsel %vm1451, %v744, 0
      %v2185 = vsel %vm339, %v2161, 0
      %2187 = vmatprep.subr.bf16.mxu0 0
      %2188 = vmatpush1.bf16.msra.mxu0 %v2148
      %2189 = vmatprep.subr.bf16.mxu0 0
      %2190 = vmatpush1.bf16.msra.mxu0 %v2147
      %2191 = vmatprep.subr.bf16.mxu0 0
      %2192 = vmatpush1.bf16.msra.mxu0 %v2146
      %2193 = vmatprep.subr.bf16.mxu0 0
      %2194 = vmatpush1.bf16.msra.mxu0 %v2145
      %2195 = vmatprep.subr.bf16.mxu0 0
      %2196 = vmatpush1.bf16.msra.mxu0 %v2144
      %2197 = vmatprep.subr.bf16.mxu0 0
      %2198 = vmatpush1.bf16.msra.mxu0 %v2143
      %2199 = vmatprep.subr.bf16.mxu0 0
      %2200 = vmatpush1.bf16.msra.mxu0 %v2142
      %2201 = vmatprep.subr.bf16.mxu0 0
      %2202 = vmatpush1.bf16.msra.mxu0 %v2141
      %2203 = vmatprep.subr.bf16.mxu0 0
      %2204 = vmatpush2.bf16.msra.mxu0 %v2156
      %2205 = vmatprep.subr.bf16.mxu0 0
      %2206 = vmatpush2.bf16.msra.mxu0 %v2155
      %2207 = vmatprep.subr.bf16.mxu0 0
      %2208 = vmatpush2.bf16.msra.mxu0 %v2154
      %2209 = vmatprep.subr.bf16.mxu0 0
      %2210 = vmatpush2.bf16.msra.mxu0 %v2153
      %2211 = vmatprep.subr.bf16.mxu0 0
      %2212 = vmatpush2.bf16.msra.mxu0 %v2152
      %2213 = vmatprep.subr.bf16.mxu0 0
      %2214 = vmatpush2.bf16.msra.mxu0 %v2151
      %2215 = vmatprep.subr.bf16.mxu0 0
      %2216 = vmatpush2.bf16.msra.mxu0 %v2150
      %2217 = vmatprep.subr.bf16.mxu0 0
      %2218 = vmatpush2.bf16.msra.mxu0 %v2149
      %2219 = vmatprep.mubr.bf16.mxu0 %v747
      %2220 = vmatmul.mubr.bf16.gmra.mxu0 %v746
      %v2221 = vpop.f32.mrf.mxu0
      %v2222 = vadd.f32 0.0, %v2221
      %v2223 = vpop.f32.mrf.mxu0
      %v2224 = vpop.f32.mrf.mxu0
      %v2225 = vpop.f32.mrf.mxu0
      %2226 = vdwg.mxu0
      %2227 = vmatprep.subr.bf16.mxu0 0
      %2228 = vmatpush1.bf16.msra.mxu0 0
      %2229 = vmatprep.subr.bf16.mxu0 0
      %2230 = vmatpush1.bf16.msra.mxu0 0
      %2231 = vmatprep.subr.bf16.mxu0 0
      %2232 = vmatpush1.bf16.msra.mxu0 0
      %2233 = vmatprep.subr.bf16.mxu0 0
      %2234 = vmatpush1.bf16.msra.mxu0 %v2185
      %2235 = vmatprep.subr.bf16.mxu0 0
      %2236 = vmatpush1.bf16.msra.mxu0 %v2160
      %2237 = vmatprep.subr.bf16.mxu0 0
      %2238 = vmatpush1.bf16.msra.mxu0 %v2159
      %2239 = vmatprep.subr.bf16.mxu0 0
      %2240 = vmatpush1.bf16.msra.mxu0 %v2158
      %2241 = vmatprep.subr.bf16.mxu0 0
      %2242 = vmatpush1.bf16.msra.mxu0 %v2157
      %2243 = vmatprep.subr.bf16.mxu0 0
      %2244 = vmatpush2.bf16.msra.mxu0 0
      %2245 = vmatprep.subr.bf16.mxu0 0
      %2246 = vmatpush2.bf16.msra.mxu0 0
      %2247 = vmatprep.subr.bf16.mxu0 0
      %2248 = vmatpush2.bf16.msra.mxu0 0
      %2249 = vmatprep.subr.bf16.mxu0 0
      %2250 = vmatpush2.bf16.msra.mxu0 0
      %2251 = vmatprep.subr.bf16.mxu0 0
      %2252 = vmatpush2.bf16.msra.mxu0 0
      %2253 = vmatprep.subr.bf16.mxu0 0
      %2254 = vmatpush2.bf16.msra.mxu0 0
      %2255 = vmatprep.subr.bf16.mxu0 0
      %2256 = vmatpush2.bf16.msra.mxu0 0
      %2257 = vmatprep.subr.bf16.mxu0 0
      %2258 = vmatpush2.bf16.msra.mxu0 0
      %2259 = vmatprep.mubr.bf16.mxu0 0
      %2260 = vmatmul.mubr.bf16.gmra.mxu0 %v2182
      %v2261 = vpop.f32.mrf.mxu0
      %v2262 = vadd.f32 %v2222, %v2261
      %v2263 = vpop.f32.mrf.mxu0
      %v2264 = vpop.f32.mrf.mxu0
      %v2265 = vpop.f32.mrf.mxu0
      %2266 = vdwg.mxu0
      %v2267 = vld [vmem:[%s6] sm:$0xf]
      %v2268 = vpack.c.bf16 %v2262, %v2262
      %v2270 = vsel %vm335, %v2267, 0
      %v2273 = vsel %vm339, %v2268, 0
      %2275 = vmatprep.subr.bf16.mxu0 0
      %2276 = vmatpush1.bf16.msra.mxu0 0
      %2277 = vmatprep.subr.bf16.mxu0 0
      %2278 = vmatpush1.bf16.msra.mxu0 0
      %2279 = vmatprep.subr.bf16.mxu0 0
      %2280 = vmatpush1.bf16.msra.mxu0 0
      %2281 = vmatprep.subr.bf16.mxu0 0
      %2282 = vmatpush1.bf16.msra.mxu0 0
      %2283 = vmatprep.subr.bf16.mxu0 0
      %2284 = vmatpush1.bf16.msra.mxu0 0
      %2285 = vmatprep.subr.bf16.mxu0 0
      %2286 = vmatpush1.bf16.msra.mxu0 0
      %2287 = vmatprep.subr.bf16.mxu0 0
      %2288 = vmatpush1.bf16.msra.mxu0 0
      %2289 = vmatprep.subr.bf16.mxu0 0
      %2290 = vmatpush1.bf16.msra.mxu0 %v2273
      %2291 = vmatprep.subr.bf16.mxu0 0
      %2292 = vmatpush2.bf16.msra.mxu0 0
      %2293 = vmatprep.subr.bf16.mxu0 0
      %2294 = vmatpush2.bf16.msra.mxu0 0
      %2295 = vmatprep.subr.bf16.mxu0 0
      %2296 = vmatpush2.bf16.msra.mxu0 0
      %2297 = vmatprep.subr.bf16.mxu0 0
      %2298 = vmatpush2.bf16.msra.mxu0 0
      %2299 = vmatprep.subr.bf16.mxu0 0
      %2300 = vmatpush2.bf16.msra.mxu0 0
      %2301 = vmatprep.subr.bf16.mxu0 0
      %2302 = vmatpush2.bf16.msra.mxu0 0
      %2303 = vmatprep.subr.bf16.mxu0 0
      %2304 = vmatpush2.bf16.msra.mxu0 0
      %2305 = vmatprep.subr.bf16.mxu0 0
      %2306 = vmatpush2.bf16.msra.mxu0 0
      %2307 = vmatprep.mubr.bf16.mxu0 0
      %2308 = vmatmul.mubr.bf16.gmra.mxu0 %v2270
      %v2309 = vpop.f32.mrf.mxu0
      %v2310 = vadd.f32 0.0, %v2309
      %v2311 = vpop.f32.mrf.mxu0
      %v2312 = vpop.f32.mrf.mxu0
      %v2313 = vpop.f32.mrf.mxu0
      %2314 = vdwg.mxu0
      %v2315 = vadd.f32 %v2015, %v2310
      %v2316 = vld [vmem:[%s7] sm:$0xff]
      %2318 = vset.pattern.permute.xlu0 0
      %2319 = vperm.xlu0 %2318, %v2316
      %v2320 = vpop.permute.xlu0 %2319
      %v2322 = vadd.f32 %v2315, %v2320
      %v2323 = vmax.f32 %v2322, 0.0
      %vm2324 = vcmask 818176
      %2325 = vst.msk [vmem:[%s303] sm:$0xff] %vm2324, %v2323
      %p2326 = scmp.lt.s32.totalorder %s19, 1
      %s2327 = scalar_select %p2326, %s19, 1
      %s2328 = smul.addr %s2327, 8
      %s2329 = scalar_lea.vmem %s8, %s2328
      // Predicated region
      $region53: #{block_forward.1} parent=51 // pred_check
        %p2330 = pneg %p210
      $region54: #{block_forward.1} parent=51 // pred_check_branch
        %2332 = sbr.rel (%p2330) target = $region56
      $region55: #{block_forward.1} parent=51 // pred_region
        _
      $region56: #{block_forward.1} parent=51 // pred_fallthru
        _
    $region52: #{block_forward.1} parent=5 // pred_fallthru
      _
    %p2333 = scmp.le.s32.totalorder 2, %s14
    // Predicated region
    $region57: #{block_forward.1} parent=5 // pred_check
      %p2334 = pneg %p2333
    $region58: #{block_forward.1} parent=5 // pred_check_branch
      %2336 = sbr.rel (%p2334) target = $region60
    $region59: #{block_forward.1} parent=5 // pred_region
      %s2337 = ssub.s32 %s14, 2
      // Predicated region
      $region61: #{block_forward.1} parent=59 // pred_check
        %p2338 = pneg %p216
      $region62: #{block_forward.1} parent=59 // pred_check_branch
        %2340 = sbr.rel (%p2338) target = $region64
      $region63: #{block_forward.1} parent=59 // pred_region
        %p2341 = scmp.lt.s32.totalorder %s20, 1
        %s2342 = scalar_select %p2341, %s20, 1
        %s2343 = smul.addr %s2342, 8
        %s2344 = scalar_lea.vmem %s8, %s2343
      $region64: #{block_forward.1} parent=59 // pred_fallthru
        _
    $region60: #{block_forward.1} parent=5 // pred_fallthru
      _
  $region6: #{block_forward.1} parent=0 // loop_footer
    %s18 = sadd.s32 1, %s14
  $region7: #{block_forward.1} parent=0 // loop_footer_branch
    %13 = sbr.rel target = $region3
  $region8: #{block_forward.1} parent=0 // loop_exit
    _

</llo_original>
